<compile_context>
chip_gen: v6e
topology: v6e:2x2x1
jax: 0.10.0
libtpu: 0.0.40
codegen_flags: <defaults>
</compile_context>

<pallas_src>
import functools

import jax
import jax.numpy as jnp
from jax import lax
from jax.experimental import pallas as pl
from jax.experimental.pallas import tpu as pltpu

NEG_SLOPE = 0.2      # HANConv leaky_relu negative_slope default
HEADS = 2            # heads=2 as in the module
NEG_INF = -1e30
OUT_PAD = 128        # lane-dense padding for the final lin3 output


def _vmem_specs(n):
    return [pl.BlockSpec(memory_space=pltpu.MemorySpace.VMEM) for _ in range(n)]


def _bf16(x):
    return x.astype(jnp.bfloat16)


# ----------------------------------------------------------------------------
# Single fused kernel: conv1 -> conv2 -> (residual) -> lin -> lin2 -> lin3 -> sigmoid.
#   x_ref    : [N, Cin]        input node features ('object' type)
#   adj_ref  : [E, N, N] int8  adjacency (adj[e, dst, src] = 1 on edge), expanded in-kernel
#   per conv layer: proj_w [Cin, C], proj_b [1, C],
#                   att_src/att_dst [E*H, C] block-diagonal per-(edge-type, head) vectors,
#                   k_w [C, C], k_b [1, C], q [1, C]   (semantic attention)
#   MLP head: w1/b1, w2/b2, w3/b3 (w3/b3 zero-padded to OUT_PAD lanes)
#   o_ref    : [N, OUT_PAD]    sigmoid output (caller slices [:, :out_ch])
# ----------------------------------------------------------------------------
def _han_fused_kernel(E, H, is_res,
                      x_ref, adj_ref,
                      pw1_ref, pb1_ref, as1_ref, ad1_ref, kw1_ref, kb1_ref, q1_ref,
                      pw2_ref, pb2_ref, as2_ref, ad2_ref, kw2_ref, kb2_ref, q2_ref,
                      w1_ref, b1_ref, w2_ref, b2_ref, w3_ref, b3_ref,
                      o_ref):
    adj = adj_ref[...]                                   # [E, N, N] int8, loaded once
    edge_masks = [adj[e] != 0 for e in range(E)]         # bool [N, N] per edge type

    def conv_layer(x, pw_ref, pb_ref, as_ref, ad_ref, kw_ref, kb_ref, q_ref):
        N = x.shape[0]
        C = pw_ref.shape[1]
        D = C // H

        # --- node projection: one lane-dense [N, C] MXU matmul ---
        xp = jnp.dot(_bf16(x), _bf16(pw_ref[...]),
                     preferred_element_type=jnp.float32) + pb_ref[...]
        xp_col = lax.broadcasted_iota(jnp.int32, (1, C), 1)

        # --- node-level attention logits: 2 consolidated matmuls for ALL edge types & heads ---
        nt = (((1,), (1,)), ((), ()))                    # contract channel dims (A @ B.T)
        alpha_s = lax.dot_general(as_ref[...], xp, nt,
                                  preferred_element_type=jnp.float32)   # [E*H, N]
        alpha_d = lax.dot_general(xp, ad_ref[...], nt,
                                  preferred_element_type=jnp.float32)   # [N, E*H]

        res = None
        for h in range(H):                               # static unroll (H = 2)
            blocks = []
            for e in range(E):                           # static unroll (E = 2)
                idx = e * H + h
                logit = alpha_d[:, idx:idx + 1] + alpha_s[idx:idx + 1, :]        # [N_dst, N_src]
                logit = jnp.where(logit > 0, logit, NEG_SLOPE * logit)           # leaky_relu
                logit = jnp.where(edge_masks[e], logit, NEG_INF)                 # mask non-edges
                # floor the max so fully-isolated dst rows softmax to all-zeros (PyG semantics);
                # assumes valid logits never fall below -1e20.
                m = jnp.maximum(jnp.max(logit, axis=-1, keepdims=True), -1e20)
                p = jnp.exp(logit - m)                   # masked entries underflow to exactly 0
                denom = jnp.sum(p, axis=-1, keepdims=True)
                blocks.append(p / jnp.maximum(denom, 1e-12))                     # exact divide
            attn_h = jnp.concatenate(blocks, axis=0)     # [E*N, N]  (edge types stacked row-wise)

            # lane-dense AV: mask xp to this head's columns and run ONE full-width matmul;
            # summing over heads reconstructs the per-head column blocks without a concat.
            head_mask = ((xp_col >= h * D) & (xp_col < (h + 1) * D)).astype(jnp.float32)
            xp_h = _bf16(xp * head_mask)                                         # [N, C]
            r = jnp.dot(_bf16(attn_h), xp_h, preferred_element_type=jnp.float32)  # [E*N, C]
            res = r if res is None else res + r

        out_all = jnp.maximum(res, 0.0)                  # per-edge-type ReLU, stacked [E*N, C]

        # --- semantic attention: ONE k_lin matmul on the stacked block ---
        k_all = jnp.tanh(jnp.dot(_bf16(out_all), _bf16(kw_ref[...]),
                                 preferred_element_type=jnp.float32) + kb_ref[...])
        q = q_ref[...]
        scores = [jnp.sum(q * jnp.mean(k_all[e * N:(e + 1) * N, :], axis=0, keepdims=True),
                          axis=-1, keepdims=True) for e in range(E)]             # each [1, 1]
        m = scores[0]
        for s in scores[1:]:
            m = jnp.maximum(m, s)
        ws = [jnp.exp(s - m) for s in scores]
        denom = ws[0]
        for w in ws[1:]:
            denom = denom + w
        inv = 1.0 / denom
        acc = (ws[0] * inv) * out_all[0:N, :]
        for e in range(1, E):
            acc = acc + (ws[e] * inv) * out_all[e * N:(e + 1) * N, :]
        return acc                                       # [N, C]

    h1 = conv_layer(x_ref[...], pw1_ref, pb1_ref, as1_ref, ad1_ref, kw1_ref, kb1_ref, q1_ref)
    h2 = conv_layer(h1, pw2_ref, pb2_ref, as2_ref, ad2_ref, kw2_ref, kb2_ref, q2_ref)
    if is_res:
        h2 = h2 + h1

    # --- fused MLP head: lin -> lin2 -> lin3 -> sigmoid (lane-dense padded output) ---
    z = jnp.dot(_bf16(h2), _bf16(w1_ref[...]), preferred_element_type=jnp.float32) + b1_ref[...]
    z = jnp.dot(_bf16(z), _bf16(w2_ref[...]), preferred_element_type=jnp.float32) + b2_ref[...]
    z = jnp.dot(_bf16(z), _bf16(w3_ref[...]), preferred_element_type=jnp.float32) + b3_ref[...]
    o_ref[...] = jax.nn.sigmoid(z).astype(o_ref.dtype)


# ----------------------------------------------------------------------------
# HAN forward (is_res=False path of the reference; is_res=True also supported).
# ----------------------------------------------------------------------------
@functools.partial(jax.jit, static_argnames=("is_res",))
def han_forward(x, adj, params, is_res=False):
    N = x.shape[0]
    E = adj.shape[0]
    out_ch = params["lin3_w"].shape[1]

    # Zero-pad lin3 to 128 output lanes for an unmasked lane-dense store; slice outside the kernel.
    w3p = jnp.zeros((params["lin3_w"].shape[0], OUT_PAD), jnp.float32).at[:, :out_ch].set(
        params["lin3_w"])
    b3p = jnp.zeros((1, OUT_PAD), jnp.float32).at[:, :out_ch].set(params["lin3_b"])

    c1, c2 = params["conv1"], params["conv2"]
    out_pad = pl.pallas_call(
        functools.partial(_han_fused_kernel, E, HEADS, is_res),
        out_shape=jax.ShapeDtypeStruct((N, OUT_PAD), jnp.float32),
        in_specs=_vmem_specs(22),
        out_specs=pl.BlockSpec(memory_space=pltpu.MemorySpace.VMEM),
    )(x, adj,
      c1["proj_w"], c1["proj_b"], c1["att_src"], c1["att_dst"], c1["k_w"], c1["k_b"], c1["q"],
      c2["proj_w"], c2["proj_b"], c2["att_src"], c2["att_dst"], c2["k_w"], c2["k_b"], c2["q"],
      params["lin_w"], params["lin_b"], params["lin2_w"], params["lin2_b"], w3p, b3p)
    return out_pad[:, :out_ch]
    # TODO(synk): is_attention=True branch has no defined code path in the reference forward.


# ----------------------------------------------------------------------------
# Deterministic parameter initialization (shapes follow PyG HANConv / nn.Linear).
# Per-(edge-type, head) attention vectors are pre-packed into a block-diagonal [E*H, C] matrix so
# the kernel gets ALL alpha_src / alpha_dst logits from a single matmul each.
# ----------------------------------------------------------------------------
def init_params(key, in_ch, hid_ch, lin_l, lin_h, lin_h2, out_ch, n_edge_types, heads=HEADS):
    keys = iter(jax.random.split(key, 64))

    def mat(shape, scale=0.1):
        return (scale * jax.random.normal(next(keys), shape)).astype(jnp.float32)

    def block_diag_att(vecs, cout):
        # vecs: [E, H, D] -> [E*H, cout] with vecs[e, h] placed at row e*H+h, cols [h*D, (h+1)*D)
        E, H, D = vecs.shape
        out = jnp.zeros((E * H, cout), jnp.float32)
        for e in range(E):
            for h in range(H):
                out = out.at[e * H + h, h * D:(h + 1) * D].set(vecs[e, h, :])
        return out

    def conv_params(cin, cout):
        D = cout // heads
        lin_src = mat((n_edge_types, heads, D))
        lin_dst = mat((n_edge_types, heads, D))
        return {
            "proj_w": mat((cin, cout)),            # node-type ('object') projection
            "proj_b": mat((1, cout)),
            "att_src": block_diag_att(lin_src, cout),
            "att_dst": block_diag_att(lin_dst, cout),
            "k_w": mat((cout, cout)),              # semantic-attention k_lin
            "k_b": mat((1, cout)),
            "q": mat((1, cout)),                   # semantic-attention query
        }

    return {
        "conv1": conv_params(in_ch, hid_ch),
        "conv2": conv_params(hid_ch, lin_l),
        "lin_w": mat((lin_l, lin_h)), "lin_b": mat((1, lin_h)),
        "lin2_w": mat((lin_h, lin_h2)), "lin2_b": mat((1, lin_h2)),
        "lin3_w": mat((lin_h2, out_ch)), "lin3_b": mat((1, out_ch)),
    }


if __name__ == "__main__":
    N = 16                    # number of 'object' nodes
    in_ch, hid_ch = 8, 16     # in_channels, hidden_channels (divisible by heads=2)
    lin_l, lin_h, lin_h2, out_ch = 16, 32, 16, 4
    n_edge_types = 2

    key = jax.random.PRNGKey(0)
    k_x, k_a, k_p = jax.random.split(key, 3)

    x = jax.random.normal(k_x, (N, in_ch), dtype=jnp.float32)          # x_dict['object']

    # edge_index_dict as dense int8 adjacency masks: random edges + a ring so every node
    # has at least one incoming edge per relation.  Expanded to the -1e30 mask in-kernel.
    rand_adj = jax.random.uniform(k_a, (n_edge_types, N, N)) < 0.3
    ring = (jnp.eye(N, k=1) + jnp.eye(N, k=-(N - 1))) > 0
    adj = jnp.logical_or(rand_adj, ring[None]).astype(jnp.int8)        # [E, N, N] 0/1

    params = init_params(k_p, in_ch, hid_ch, lin_l, lin_h, lin_h2, out_ch, n_edge_types)

    out = han_forward(x, adj, params, is_res=False)
    out = jax.block_until_ready(out)
    assert out.shape == (N, out_ch) and out.dtype == jnp.float32
    assert bool(jnp.all(jnp.isfinite(out)))
    print("KERNEL_OK")
</pallas_src>

<mosaic_0001>
module attributes {stable_mosaic.version = 11 : i64} {
  func.func @_han_fused_kernel(%arg0: memref<16x8xf32, #tpu.memory_space<vmem>>, %arg1: memref<2x16x16xi8, #tpu.memory_space<vmem>>, %arg2: memref<8x16xf32, #tpu.memory_space<vmem>>, %arg3: memref<1x16xf32, #tpu.memory_space<vmem>>, %arg4: memref<4x16xf32, #tpu.memory_space<vmem>>, %arg5: memref<4x16xf32, #tpu.memory_space<vmem>>, %arg6: memref<16x16xf32, #tpu.memory_space<vmem>>, %arg7: memref<1x16xf32, #tpu.memory_space<vmem>>, %arg8: memref<1x16xf32, #tpu.memory_space<vmem>>, %arg9: memref<16x16xf32, #tpu.memory_space<vmem>>, %arg10: memref<1x16xf32, #tpu.memory_space<vmem>>, %arg11: memref<4x16xf32, #tpu.memory_space<vmem>>, %arg12: memref<4x16xf32, #tpu.memory_space<vmem>>, %arg13: memref<16x16xf32, #tpu.memory_space<vmem>>, %arg14: memref<1x16xf32, #tpu.memory_space<vmem>>, %arg15: memref<1x16xf32, #tpu.memory_space<vmem>>, %arg16: memref<16x32xf32, #tpu.memory_space<vmem>>, %arg17: memref<1x32xf32, #tpu.memory_space<vmem>>, %arg18: memref<32x16xf32, #tpu.memory_space<vmem>>, %arg19: memref<1x16xf32, #tpu.memory_space<vmem>>, %arg20: memref<16x128xf32, #tpu.memory_space<vmem>>, %arg21: memref<1x128xf32, #tpu.memory_space<vmem>>, %arg22: memref<16x128xf32, #tpu.memory_space<vmem>>) attributes {dimension_semantics = [], scalar_prefetch = 0 : i64, scratch_operands = 0 : i64, tpu.core_type = #tpu.core_type<tc>} {
    %c0 = arith.constant 0 : index
    %c0_0 = arith.constant 0 : index
    %c0_1 = arith.constant 0 : index
    %0 = vector.load %arg1[%c0, %c0_0, %c0_1] : memref<2x16x16xi8, #tpu.memory_space<vmem>>, vector<2x16x16xi8>
    %1 = vector.extract_strided_slice %0 {offsets = [0, 0, 0], sizes = [1, 16, 16], strides = [1, 1, 1]} : vector<2x16x16xi8> to vector<1x16x16xi8>
    %2 = vector.shape_cast %1 : vector<1x16x16xi8> to vector<16x16xi8>
    %c0_i8 = arith.constant 0 : i8
    %3 = vector.broadcast %c0_i8 : i8 to vector<16x16xi8>
    %4 = arith.cmpi ne, %2, %3 : vector<16x16xi8>
    %5 = vector.extract_strided_slice %0 {offsets = [1, 0, 0], sizes = [1, 16, 16], strides = [1, 1, 1]} : vector<2x16x16xi8> to vector<1x16x16xi8>
    %6 = vector.shape_cast %5 : vector<1x16x16xi8> to vector<16x16xi8>
    %c0_i8_2 = arith.constant 0 : i8
    %7 = vector.broadcast %c0_i8_2 : i8 to vector<16x16xi8>
    %8 = arith.cmpi ne, %6, %7 : vector<16x16xi8>
    %c0_3 = arith.constant 0 : index
    %c0_4 = arith.constant 0 : index
    %9 = vector.load %arg0[%c0_3, %c0_4] : memref<16x8xf32, #tpu.memory_space<vmem>>, vector<16x8xf32>
    %10 = arith.truncf %9 : vector<16x8xf32> to vector<16x8xbf16>
    %c0_5 = arith.constant 0 : index
    %c0_6 = arith.constant 0 : index
    %11 = vector.load %arg2[%c0_5, %c0_6] : memref<8x16xf32, #tpu.memory_space<vmem>>, vector<8x16xf32>
    %12 = arith.truncf %11 : vector<8x16xf32> to vector<8x16xbf16>
    %cst = arith.constant dense<0.000000e+00> : vector<16x16xf32>
    %13 = tpu.matmul %10, %12, %cst {dimension_numbers = #tpu.dot_dimension_numbers<[1], [0], [0], [1], [0, 0, 1, 1], [], []>} : vector<16x8xbf16>, vector<8x16xbf16>, vector<16x16xf32> -> vector<16x16xf32>
    %c0_7 = arith.constant 0 : index
    %c0_8 = arith.constant 0 : index
    %14 = vector.load %arg3[%c0_7, %c0_8] : memref<1x16xf32, #tpu.memory_space<vmem>>, vector<1x16xf32>
    %15 = vector.broadcast %14 : vector<1x16xf32> to vector<16x16xf32>
    %16 = arith.addf %13, %15 : vector<16x16xf32>
    %17 = tpu.iota {dimensions = array<i32: 1>} : vector<1x16xi32>
    %c0_9 = arith.constant 0 : index
    %c0_10 = arith.constant 0 : index
    %18 = vector.load %arg4[%c0_9, %c0_10] : memref<4x16xf32, #tpu.memory_space<vmem>>, vector<4x16xf32>
    %cst_11 = arith.constant dense<0.000000e+00> : vector<4x16xf32>
    %19 = tpu.matmul %18, %16, %cst_11 {dimension_numbers = #tpu.dot_dimension_numbers<[1], [1], [0], [0], [0, 0, 1, 0], [], []>} : vector<4x16xf32>, vector<16x16xf32>, vector<4x16xf32> -> vector<4x16xf32>
    %c0_12 = arith.constant 0 : index
    %c0_13 = arith.constant 0 : index
    %20 = vector.load %arg5[%c0_12, %c0_13] : memref<4x16xf32, #tpu.memory_space<vmem>>, vector<4x16xf32>
    %cst_14 = arith.constant dense<0.000000e+00> : vector<16x4xf32>
    %21 = tpu.matmul %16, %20, %cst_14 {dimension_numbers = #tpu.dot_dimension_numbers<[1], [1], [0], [0], [0, 0, 1, 0], [], []>} : vector<16x16xf32>, vector<4x16xf32>, vector<16x4xf32> -> vector<16x4xf32>
    %22 = vector.extract_strided_slice %21 {offsets = [0, 0], sizes = [16, 1], strides = [1, 1]} : vector<16x4xf32> to vector<16x1xf32>
    %23 = vector.extract_strided_slice %19 {offsets = [0, 0], sizes = [1, 16], strides = [1, 1]} : vector<4x16xf32> to vector<1x16xf32>
    %24 = vector.broadcast %22 : vector<16x1xf32> to vector<16x16xf32>
    %25 = vector.broadcast %23 : vector<1x16xf32> to vector<16x16xf32>
    %26 = arith.addf %24, %25 : vector<16x16xf32>
    %cst_15 = arith.constant 0.000000e+00 : f32
    %27 = vector.broadcast %cst_15 : f32 to vector<16x16xf32>
    %28 = arith.cmpf ogt, %26, %27 : vector<16x16xf32>
    %cst_16 = arith.constant 2.000000e-01 : f32
    %29 = vector.broadcast %cst_16 : f32 to vector<16x16xf32>
    %30 = arith.mulf %29, %26 : vector<16x16xf32>
    %31 = arith.select %28, %26, %30 : vector<16x16xi1>, vector<16x16xf32>
    %cst_17 = arith.constant -1.000000e+30 : f32
    %32 = vector.broadcast %cst_17 : f32 to vector<16x16xf32>
    %33 = arith.select %4, %31, %32 : vector<16x16xi1>, vector<16x16xf32>
    %cst_18 = arith.constant dense<0xFF800000> : vector<16xf32>
    %34 = vector.multi_reduction <maximumf>, %33, %cst_18 [1] : vector<16x16xf32> to vector<16xf32>
    %35 = vector.shape_cast %34 : vector<16xf32> to vector<16x1xf32>
    %cst_19 = arith.constant -1.000000e+20 : f32
    %36 = vector.broadcast %cst_19 : f32 to vector<16x1xf32>
    %37 = arith.maximumf %35, %36 : vector<16x1xf32>
    %38 = vector.broadcast %37 : vector<16x1xf32> to vector<16x16xf32>
    %39 = arith.subf %33, %38 : vector<16x16xf32>
    %40 = math.exp %39 : vector<16x16xf32>
    %cst_20 = arith.constant dense<0.000000e+00> : vector<16xf32>
    %41 = vector.multi_reduction <add>, %40, %cst_20 [1] : vector<16x16xf32> to vector<16xf32>
    %42 = vector.shape_cast %41 : vector<16xf32> to vector<16x1xf32>
    %cst_21 = arith.constant 9.99999996E-13 : f32
    %43 = vector.broadcast %cst_21 : f32 to vector<16x1xf32>
    %44 = arith.maximumf %42, %43 : vector<16x1xf32>
    %45 = vector.broadcast %44 : vector<16x1xf32> to vector<16x16xf32>
    %46 = arith.divf %40, %45 : vector<16x16xf32>
    %47 = vector.extract_strided_slice %21 {offsets = [0, 2], sizes = [16, 1], strides = [1, 1]} : vector<16x4xf32> to vector<16x1xf32>
    %48 = vector.extract_strided_slice %19 {offsets = [2, 0], sizes = [1, 16], strides = [1, 1]} : vector<4x16xf32> to vector<1x16xf32>
    %49 = vector.broadcast %47 : vector<16x1xf32> to vector<16x16xf32>
    %50 = vector.broadcast %48 : vector<1x16xf32> to vector<16x16xf32>
    %51 = arith.addf %49, %50 : vector<16x16xf32>
    %cst_22 = arith.constant 0.000000e+00 : f32
    %52 = vector.broadcast %cst_22 : f32 to vector<16x16xf32>
    %53 = arith.cmpf ogt, %51, %52 : vector<16x16xf32>
    %cst_23 = arith.constant 2.000000e-01 : f32
    %54 = vector.broadcast %cst_23 : f32 to vector<16x16xf32>
    %55 = arith.mulf %54, %51 : vector<16x16xf32>
    %56 = arith.select %53, %51, %55 : vector<16x16xi1>, vector<16x16xf32>
    %cst_24 = arith.constant -1.000000e+30 : f32
    %57 = vector.broadcast %cst_24 : f32 to vector<16x16xf32>
    %58 = arith.select %8, %56, %57 : vector<16x16xi1>, vector<16x16xf32>
    %cst_25 = arith.constant dense<0xFF800000> : vector<16xf32>
    %59 = vector.multi_reduction <maximumf>, %58, %cst_25 [1] : vector<16x16xf32> to vector<16xf32>
    %60 = vector.shape_cast %59 : vector<16xf32> to vector<16x1xf32>
    %cst_26 = arith.constant -1.000000e+20 : f32
    %61 = vector.broadcast %cst_26 : f32 to vector<16x1xf32>
    %62 = arith.maximumf %60, %61 : vector<16x1xf32>
    %63 = vector.broadcast %62 : vector<16x1xf32> to vector<16x16xf32>
    %64 = arith.subf %58, %63 : vector<16x16xf32>
    %65 = math.exp %64 : vector<16x16xf32>
    %cst_27 = arith.constant dense<0.000000e+00> : vector<16xf32>
    %66 = vector.multi_reduction <add>, %65, %cst_27 [1] : vector<16x16xf32> to vector<16xf32>
    %67 = vector.shape_cast %66 : vector<16xf32> to vector<16x1xf32>
    %cst_28 = arith.constant 9.99999996E-13 : f32
    %68 = vector.broadcast %cst_28 : f32 to vector<16x1xf32>
    %69 = arith.maximumf %67, %68 : vector<16x1xf32>
    %70 = vector.broadcast %69 : vector<16x1xf32> to vector<16x16xf32>
    %71 = arith.divf %65, %70 : vector<16x16xf32>
    %72 = tpu.concatenate %46, %71 in 0 : vector<16x16xf32>, vector<16x16xf32> -> vector<32x16xf32>
    %c0_i32 = arith.constant 0 : i32
    %73 = vector.broadcast %c0_i32 : i32 to vector<1x16xi32>
    %74 = arith.cmpi sge, %17, %73 : vector<1x16xi32>
    %c8_i32 = arith.constant 8 : i32
    %75 = vector.broadcast %c8_i32 : i32 to vector<1x16xi32>
    %76 = arith.cmpi slt, %17, %75 : vector<1x16xi32>
    %77 = arith.andi %74, %76 : vector<1x16xi1>
    %78 = arith.extui %77 : vector<1x16xi1> to vector<1x16xi32>
    %79 = arith.sitofp %78 : vector<1x16xi32> to vector<1x16xf32>
    %80 = vector.broadcast %79 : vector<1x16xf32> to vector<16x16xf32>
    %81 = arith.mulf %16, %80 : vector<16x16xf32>
    %82 = arith.truncf %81 : vector<16x16xf32> to vector<16x16xbf16>
    %83 = arith.truncf %72 : vector<32x16xf32> to vector<32x16xbf16>
    %cst_29 = arith.constant dense<0.000000e+00> : vector<32x16xf32>
    %84 = tpu.matmul %83, %82, %cst_29 {dimension_numbers = #tpu.dot_dimension_numbers<[1], [0], [0], [1], [0, 0, 1, 1], [], []>} : vector<32x16xbf16>, vector<16x16xbf16>, vector<32x16xf32> -> vector<32x16xf32>
    %85 = vector.extract_strided_slice %21 {offsets = [0, 1], sizes = [16, 1], strides = [1, 1]} : vector<16x4xf32> to vector<16x1xf32>
    %86 = vector.extract_strided_slice %19 {offsets = [1, 0], sizes = [1, 16], strides = [1, 1]} : vector<4x16xf32> to vector<1x16xf32>
    %87 = vector.broadcast %85 : vector<16x1xf32> to vector<16x16xf32>
    %88 = vector.broadcast %86 : vector<1x16xf32> to vector<16x16xf32>
    %89 = arith.addf %87, %88 : vector<16x16xf32>
    %cst_30 = arith.constant 0.000000e+00 : f32
    %90 = vector.broadcast %cst_30 : f32 to vector<16x16xf32>
    %91 = arith.cmpf ogt, %89, %90 : vector<16x16xf32>
    %cst_31 = arith.constant 2.000000e-01 : f32
    %92 = vector.broadcast %cst_31 : f32 to vector<16x16xf32>
    %93 = arith.mulf %92, %89 : vector<16x16xf32>
    %94 = arith.select %91, %89, %93 : vector<16x16xi1>, vector<16x16xf32>
    %cst_32 = arith.constant -1.000000e+30 : f32
    %95 = vector.broadcast %cst_32 : f32 to vector<16x16xf32>
    %96 = arith.select %4, %94, %95 : vector<16x16xi1>, vector<16x16xf32>
    %cst_33 = arith.constant dense<0xFF800000> : vector<16xf32>
    %97 = vector.multi_reduction <maximumf>, %96, %cst_33 [1] : vector<16x16xf32> to vector<16xf32>
    %98 = vector.shape_cast %97 : vector<16xf32> to vector<16x1xf32>
    %cst_34 = arith.constant -1.000000e+20 : f32
    %99 = vector.broadcast %cst_34 : f32 to vector<16x1xf32>
    %100 = arith.maximumf %98, %99 : vector<16x1xf32>
    %101 = vector.broadcast %100 : vector<16x1xf32> to vector<16x16xf32>
    %102 = arith.subf %96, %101 : vector<16x16xf32>
    %103 = math.exp %102 : vector<16x16xf32>
    %cst_35 = arith.constant dense<0.000000e+00> : vector<16xf32>
    %104 = vector.multi_reduction <add>, %103, %cst_35 [1] : vector<16x16xf32> to vector<16xf32>
    %105 = vector.shape_cast %104 : vector<16xf32> to vector<16x1xf32>
    %cst_36 = arith.constant 9.99999996E-13 : f32
    %106 = vector.broadcast %cst_36 : f32 to vector<16x1xf32>
    %107 = arith.maximumf %105, %106 : vector<16x1xf32>
    %108 = vector.broadcast %107 : vector<16x1xf32> to vector<16x16xf32>
    %109 = arith.divf %103, %108 : vector<16x16xf32>
    %110 = vector.extract_strided_slice %21 {offsets = [0, 3], sizes = [16, 1], strides = [1, 1]} : vector<16x4xf32> to vector<16x1xf32>
    %111 = vector.extract_strided_slice %19 {offsets = [3, 0], sizes = [1, 16], strides = [1, 1]} : vector<4x16xf32> to vector<1x16xf32>
    %112 = vector.broadcast %110 : vector<16x1xf32> to vector<16x16xf32>
    %113 = vector.broadcast %111 : vector<1x16xf32> to vector<16x16xf32>
    %114 = arith.addf %112, %113 : vector<16x16xf32>
    %cst_37 = arith.constant 0.000000e+00 : f32
    %115 = vector.broadcast %cst_37 : f32 to vector<16x16xf32>
    %116 = arith.cmpf ogt, %114, %115 : vector<16x16xf32>
    %cst_38 = arith.constant 2.000000e-01 : f32
    %117 = vector.broadcast %cst_38 : f32 to vector<16x16xf32>
    %118 = arith.mulf %117, %114 : vector<16x16xf32>
    %119 = arith.select %116, %114, %118 : vector<16x16xi1>, vector<16x16xf32>
    %cst_39 = arith.constant -1.000000e+30 : f32
    %120 = vector.broadcast %cst_39 : f32 to vector<16x16xf32>
    %121 = arith.select %8, %119, %120 : vector<16x16xi1>, vector<16x16xf32>
    %cst_40 = arith.constant dense<0xFF800000> : vector<16xf32>
    %122 = vector.multi_reduction <maximumf>, %121, %cst_40 [1] : vector<16x16xf32> to vector<16xf32>
    %123 = vector.shape_cast %122 : vector<16xf32> to vector<16x1xf32>
    %cst_41 = arith.constant -1.000000e+20 : f32
    %124 = vector.broadcast %cst_41 : f32 to vector<16x1xf32>
    %125 = arith.maximumf %123, %124 : vector<16x1xf32>
    %126 = vector.broadcast %125 : vector<16x1xf32> to vector<16x16xf32>
    %127 = arith.subf %121, %126 : vector<16x16xf32>
    %128 = math.exp %127 : vector<16x16xf32>
    %cst_42 = arith.constant dense<0.000000e+00> : vector<16xf32>
    %129 = vector.multi_reduction <add>, %128, %cst_42 [1] : vector<16x16xf32> to vector<16xf32>
    %130 = vector.shape_cast %129 : vector<16xf32> to vector<16x1xf32>
    %cst_43 = arith.constant 9.99999996E-13 : f32
    %131 = vector.broadcast %cst_43 : f32 to vector<16x1xf32>
    %132 = arith.maximumf %130, %131 : vector<16x1xf32>
    %133 = vector.broadcast %132 : vector<16x1xf32> to vector<16x16xf32>
    %134 = arith.divf %128, %133 : vector<16x16xf32>
    %135 = tpu.concatenate %109, %134 in 0 : vector<16x16xf32>, vector<16x16xf32> -> vector<32x16xf32>
    %c8_i32_44 = arith.constant 8 : i32
    %136 = vector.broadcast %c8_i32_44 : i32 to vector<1x16xi32>
    %137 = arith.cmpi sge, %17, %136 : vector<1x16xi32>
    %c16_i32 = arith.constant 16 : i32
    %138 = vector.broadcast %c16_i32 : i32 to vector<1x16xi32>
    %139 = arith.cmpi slt, %17, %138 : vector<1x16xi32>
    %140 = arith.andi %137, %139 : vector<1x16xi1>
    %141 = arith.extui %140 : vector<1x16xi1> to vector<1x16xi32>
    %142 = arith.sitofp %141 : vector<1x16xi32> to vector<1x16xf32>
    %143 = vector.broadcast %142 : vector<1x16xf32> to vector<16x16xf32>
    %144 = arith.mulf %16, %143 : vector<16x16xf32>
    %145 = arith.truncf %144 : vector<16x16xf32> to vector<16x16xbf16>
    %146 = arith.truncf %135 : vector<32x16xf32> to vector<32x16xbf16>
    %cst_45 = arith.constant dense<0.000000e+00> : vector<32x16xf32>
    %147 = tpu.matmul %146, %145, %cst_45 {dimension_numbers = #tpu.dot_dimension_numbers<[1], [0], [0], [1], [0, 0, 1, 1], [], []>} : vector<32x16xbf16>, vector<16x16xbf16>, vector<32x16xf32> -> vector<32x16xf32>
    %148 = arith.addf %84, %147 : vector<32x16xf32>
    %cst_46 = arith.constant 0.000000e+00 : f32
    %149 = vector.broadcast %cst_46 : f32 to vector<32x16xf32>
    %150 = arith.maximumf %148, %149 : vector<32x16xf32>
    %151 = arith.truncf %150 : vector<32x16xf32> to vector<32x16xbf16>
    %c0_47 = arith.constant 0 : index
    %c0_48 = arith.constant 0 : index
    %152 = vector.load %arg6[%c0_47, %c0_48] : memref<16x16xf32, #tpu.memory_space<vmem>>, vector<16x16xf32>
    %153 = arith.truncf %152 : vector<16x16xf32> to vector<16x16xbf16>
    %cst_49 = arith.constant dense<0.000000e+00> : vector<32x16xf32>
    %154 = tpu.matmul %151, %153, %cst_49 {dimension_numbers = #tpu.dot_dimension_numbers<[1], [0], [0], [1], [0, 0, 1, 1], [], []>} : vector<32x16xbf16>, vector<16x16xbf16>, vector<32x16xf32> -> vector<32x16xf32>
    %c0_50 = arith.constant 0 : index
    %c0_51 = arith.constant 0 : index
    %155 = vector.load %arg7[%c0_50, %c0_51] : memref<1x16xf32, #tpu.memory_space<vmem>>, vector<1x16xf32>
    %156 = vector.broadcast %155 : vector<1x16xf32> to vector<32x16xf32>
    %157 = arith.addf %154, %156 : vector<32x16xf32>
    %158 = math.tanh %157 : vector<32x16xf32>
    %c0_52 = arith.constant 0 : index
    %c0_53 = arith.constant 0 : index
    %159 = vector.load %arg8[%c0_52, %c0_53] : memref<1x16xf32, #tpu.memory_space<vmem>>, vector<1x16xf32>
    %160 = vector.extract_strided_slice %158 {offsets = [0, 0], sizes = [16, 16], strides = [1, 1]} : vector<32x16xf32> to vector<16x16xf32>
    %cst_54 = arith.constant dense<0.000000e+00> : vector<16xf32>
    %161 = vector.multi_reduction <add>, %160, %cst_54 [0] : vector<16x16xf32> to vector<16xf32>
    %162 = vector.shape_cast %161 : vector<16xf32> to vector<1x16xf32>
    %cst_55 = arith.constant 1.600000e+01 : f32
    %163 = vector.broadcast %cst_55 : f32 to vector<1x16xf32>
    %164 = arith.divf %162, %163 : vector<1x16xf32>
    %165 = arith.mulf %159, %164 : vector<1x16xf32>
    %cst_56 = arith.constant dense<0.000000e+00> : vector<1xf32>
    %166 = vector.multi_reduction <add>, %165, %cst_56 [1] : vector<1x16xf32> to vector<1xf32>
    %167 = vector.shape_cast %166 : vector<1xf32> to vector<1x1xf32>
    %168 = vector.extract_strided_slice %158 {offsets = [16, 0], sizes = [16, 16], strides = [1, 1]} : vector<32x16xf32> to vector<16x16xf32>
    %cst_57 = arith.constant dense<0.000000e+00> : vector<16xf32>
    %169 = vector.multi_reduction <add>, %168, %cst_57 [0] : vector<16x16xf32> to vector<16xf32>
    %170 = vector.shape_cast %169 : vector<16xf32> to vector<1x16xf32>
    %cst_58 = arith.constant 1.600000e+01 : f32
    %171 = vector.broadcast %cst_58 : f32 to vector<1x16xf32>
    %172 = arith.divf %170, %171 : vector<1x16xf32>
    %173 = arith.mulf %159, %172 : vector<1x16xf32>
    %cst_59 = arith.constant dense<0.000000e+00> : vector<1xf32>
    %174 = vector.multi_reduction <add>, %173, %cst_59 [1] : vector<1x16xf32> to vector<1xf32>
    %175 = vector.shape_cast %174 : vector<1xf32> to vector<1x1xf32>
    %176 = arith.maximumf %167, %175 : vector<1x1xf32>
    %177 = arith.subf %167, %176 : vector<1x1xf32>
    %178 = math.exp %177 : vector<1x1xf32>
    %179 = arith.subf %175, %176 : vector<1x1xf32>
    %180 = math.exp %179 : vector<1x1xf32>
    %181 = arith.addf %178, %180 : vector<1x1xf32>
    %cst_60 = arith.constant 1.000000e+00 : f32
    %182 = vector.broadcast %cst_60 : f32 to vector<1x1xf32>
    %183 = arith.divf %182, %181 : vector<1x1xf32>
    %184 = arith.mulf %178, %183 : vector<1x1xf32>
    %185 = vector.extract_strided_slice %150 {offsets = [0, 0], sizes = [16, 16], strides = [1, 1]} : vector<32x16xf32> to vector<16x16xf32>
    %186 = vector.broadcast %184 : vector<1x1xf32> to vector<16x16xf32>
    %187 = arith.mulf %186, %185 : vector<16x16xf32>
    %188 = arith.mulf %180, %183 : vector<1x1xf32>
    %189 = vector.extract_strided_slice %150 {offsets = [16, 0], sizes = [16, 16], strides = [1, 1]} : vector<32x16xf32> to vector<16x16xf32>
    %190 = vector.broadcast %188 : vector<1x1xf32> to vector<16x16xf32>
    %191 = arith.mulf %190, %189 : vector<16x16xf32>
    %192 = arith.addf %187, %191 : vector<16x16xf32>
    %193 = arith.truncf %192 : vector<16x16xf32> to vector<16x16xbf16>
    %c0_61 = arith.constant 0 : index
    %c0_62 = arith.constant 0 : index
    %194 = vector.load %arg9[%c0_61, %c0_62] : memref<16x16xf32, #tpu.memory_space<vmem>>, vector<16x16xf32>
    %195 = arith.truncf %194 : vector<16x16xf32> to vector<16x16xbf16>
    %cst_63 = arith.constant dense<0.000000e+00> : vector<16x16xf32>
    %196 = tpu.matmul %193, %195, %cst_63 {dimension_numbers = #tpu.dot_dimension_numbers<[1], [0], [0], [1], [0, 0, 1, 1], [], []>} : vector<16x16xbf16>, vector<16x16xbf16>, vector<16x16xf32> -> vector<16x16xf32>
    %c0_64 = arith.constant 0 : index
    %c0_65 = arith.constant 0 : index
    %197 = vector.load %arg10[%c0_64, %c0_65] : memref<1x16xf32, #tpu.memory_space<vmem>>, vector<1x16xf32>
    %198 = vector.broadcast %197 : vector<1x16xf32> to vector<16x16xf32>
    %199 = arith.addf %196, %198 : vector<16x16xf32>
    %200 = tpu.iota {dimensions = array<i32: 1>} : vector<1x16xi32>
    %c0_66 = arith.constant 0 : index
    %c0_67 = arith.constant 0 : index
    %201 = vector.load %arg11[%c0_66, %c0_67] : memref<4x16xf32, #tpu.memory_space<vmem>>, vector<4x16xf32>
    %cst_68 = arith.constant dense<0.000000e+00> : vector<4x16xf32>
    %202 = tpu.matmul %201, %199, %cst_68 {dimension_numbers = #tpu.dot_dimension_numbers<[1], [1], [0], [0], [0, 0, 1, 0], [], []>} : vector<4x16xf32>, vector<16x16xf32>, vector<4x16xf32> -> vector<4x16xf32>
    %c0_69 = arith.constant 0 : index
    %c0_70 = arith.constant 0 : index
    %203 = vector.load %arg12[%c0_69, %c0_70] : memref<4x16xf32, #tpu.memory_space<vmem>>, vector<4x16xf32>
    %cst_71 = arith.constant dense<0.000000e+00> : vector<16x4xf32>
    %204 = tpu.matmul %199, %203, %cst_71 {dimension_numbers = #tpu.dot_dimension_numbers<[1], [1], [0], [0], [0, 0, 1, 0], [], []>} : vector<16x16xf32>, vector<4x16xf32>, vector<16x4xf32> -> vector<16x4xf32>
    %205 = vector.extract_strided_slice %204 {offsets = [0, 0], sizes = [16, 1], strides = [1, 1]} : vector<16x4xf32> to vector<16x1xf32>
    %206 = vector.extract_strided_slice %202 {offsets = [0, 0], sizes = [1, 16], strides = [1, 1]} : vector<4x16xf32> to vector<1x16xf32>
    %207 = vector.broadcast %205 : vector<16x1xf32> to vector<16x16xf32>
    %208 = vector.broadcast %206 : vector<1x16xf32> to vector<16x16xf32>
    %209 = arith.addf %207, %208 : vector<16x16xf32>
    %cst_72 = arith.constant 0.000000e+00 : f32
    %210 = vector.broadcast %cst_72 : f32 to vector<16x16xf32>
    %211 = arith.cmpf ogt, %209, %210 : vector<16x16xf32>
    %cst_73 = arith.constant 2.000000e-01 : f32
    %212 = vector.broadcast %cst_73 : f32 to vector<16x16xf32>
    %213 = arith.mulf %212, %209 : vector<16x16xf32>
    %214 = arith.select %211, %209, %213 : vector<16x16xi1>, vector<16x16xf32>
    %cst_74 = arith.constant -1.000000e+30 : f32
    %215 = vector.broadcast %cst_74 : f32 to vector<16x16xf32>
    %216 = arith.select %4, %214, %215 : vector<16x16xi1>, vector<16x16xf32>
    %cst_75 = arith.constant dense<0xFF800000> : vector<16xf32>
    %217 = vector.multi_reduction <maximumf>, %216, %cst_75 [1] : vector<16x16xf32> to vector<16xf32>
    %218 = vector.shape_cast %217 : vector<16xf32> to vector<16x1xf32>
    %cst_76 = arith.constant -1.000000e+20 : f32
    %219 = vector.broadcast %cst_76 : f32 to vector<16x1xf32>
    %220 = arith.maximumf %218, %219 : vector<16x1xf32>
    %221 = vector.broadcast %220 : vector<16x1xf32> to vector<16x16xf32>
    %222 = arith.subf %216, %221 : vector<16x16xf32>
    %223 = math.exp %222 : vector<16x16xf32>
    %cst_77 = arith.constant dense<0.000000e+00> : vector<16xf32>
    %224 = vector.multi_reduction <add>, %223, %cst_77 [1] : vector<16x16xf32> to vector<16xf32>
    %225 = vector.shape_cast %224 : vector<16xf32> to vector<16x1xf32>
    %cst_78 = arith.constant 9.99999996E-13 : f32
    %226 = vector.broadcast %cst_78 : f32 to vector<16x1xf32>
    %227 = arith.maximumf %225, %226 : vector<16x1xf32>
    %228 = vector.broadcast %227 : vector<16x1xf32> to vector<16x16xf32>
    %229 = arith.divf %223, %228 : vector<16x16xf32>
    %230 = vector.extract_strided_slice %204 {offsets = [0, 2], sizes = [16, 1], strides = [1, 1]} : vector<16x4xf32> to vector<16x1xf32>
    %231 = vector.extract_strided_slice %202 {offsets = [2, 0], sizes = [1, 16], strides = [1, 1]} : vector<4x16xf32> to vector<1x16xf32>
    %232 = vector.broadcast %230 : vector<16x1xf32> to vector<16x16xf32>
    %233 = vector.broadcast %231 : vector<1x16xf32> to vector<16x16xf32>
    %234 = arith.addf %232, %233 : vector<16x16xf32>
    %cst_79 = arith.constant 0.000000e+00 : f32
    %235 = vector.broadcast %cst_79 : f32 to vector<16x16xf32>
    %236 = arith.cmpf ogt, %234, %235 : vector<16x16xf32>
    %cst_80 = arith.constant 2.000000e-01 : f32
    %237 = vector.broadcast %cst_80 : f32 to vector<16x16xf32>
    %238 = arith.mulf %237, %234 : vector<16x16xf32>
    %239 = arith.select %236, %234, %238 : vector<16x16xi1>, vector<16x16xf32>
    %cst_81 = arith.constant -1.000000e+30 : f32
    %240 = vector.broadcast %cst_81 : f32 to vector<16x16xf32>
    %241 = arith.select %8, %239, %240 : vector<16x16xi1>, vector<16x16xf32>
    %cst_82 = arith.constant dense<0xFF800000> : vector<16xf32>
    %242 = vector.multi_reduction <maximumf>, %241, %cst_82 [1] : vector<16x16xf32> to vector<16xf32>
    %243 = vector.shape_cast %242 : vector<16xf32> to vector<16x1xf32>
    %cst_83 = arith.constant -1.000000e+20 : f32
    %244 = vector.broadcast %cst_83 : f32 to vector<16x1xf32>
    %245 = arith.maximumf %243, %244 : vector<16x1xf32>
    %246 = vector.broadcast %245 : vector<16x1xf32> to vector<16x16xf32>
    %247 = arith.subf %241, %246 : vector<16x16xf32>
    %248 = math.exp %247 : vector<16x16xf32>
    %cst_84 = arith.constant dense<0.000000e+00> : vector<16xf32>
    %249 = vector.multi_reduction <add>, %248, %cst_84 [1] : vector<16x16xf32> to vector<16xf32>
    %250 = vector.shape_cast %249 : vector<16xf32> to vector<16x1xf32>
    %cst_85 = arith.constant 9.99999996E-13 : f32
    %251 = vector.broadcast %cst_85 : f32 to vector<16x1xf32>
    %252 = arith.maximumf %250, %251 : vector<16x1xf32>
    %253 = vector.broadcast %252 : vector<16x1xf32> to vector<16x16xf32>
    %254 = arith.divf %248, %253 : vector<16x16xf32>
    %255 = tpu.concatenate %229, %254 in 0 : vector<16x16xf32>, vector<16x16xf32> -> vector<32x16xf32>
    %c0_i32_86 = arith.constant 0 : i32
    %256 = vector.broadcast %c0_i32_86 : i32 to vector<1x16xi32>
    %257 = arith.cmpi sge, %200, %256 : vector<1x16xi32>
    %c8_i32_87 = arith.constant 8 : i32
    %258 = vector.broadcast %c8_i32_87 : i32 to vector<1x16xi32>
    %259 = arith.cmpi slt, %200, %258 : vector<1x16xi32>
    %260 = arith.andi %257, %259 : vector<1x16xi1>
    %261 = arith.extui %260 : vector<1x16xi1> to vector<1x16xi32>
    %262 = arith.sitofp %261 : vector<1x16xi32> to vector<1x16xf32>
    %263 = vector.broadcast %262 : vector<1x16xf32> to vector<16x16xf32>
    %264 = arith.mulf %199, %263 : vector<16x16xf32>
    %265 = arith.truncf %264 : vector<16x16xf32> to vector<16x16xbf16>
    %266 = arith.truncf %255 : vector<32x16xf32> to vector<32x16xbf16>
    %cst_88 = arith.constant dense<0.000000e+00> : vector<32x16xf32>
    %267 = tpu.matmul %266, %265, %cst_88 {dimension_numbers = #tpu.dot_dimension_numbers<[1], [0], [0], [1], [0, 0, 1, 1], [], []>} : vector<32x16xbf16>, vector<16x16xbf16>, vector<32x16xf32> -> vector<32x16xf32>
    %268 = vector.extract_strided_slice %204 {offsets = [0, 1], sizes = [16, 1], strides = [1, 1]} : vector<16x4xf32> to vector<16x1xf32>
    %269 = vector.extract_strided_slice %202 {offsets = [1, 0], sizes = [1, 16], strides = [1, 1]} : vector<4x16xf32> to vector<1x16xf32>
    %270 = vector.broadcast %268 : vector<16x1xf32> to vector<16x16xf32>
    %271 = vector.broadcast %269 : vector<1x16xf32> to vector<16x16xf32>
    %272 = arith.addf %270, %271 : vector<16x16xf32>
    %cst_89 = arith.constant 0.000000e+00 : f32
    %273 = vector.broadcast %cst_89 : f32 to vector<16x16xf32>
    %274 = arith.cmpf ogt, %272, %273 : vector<16x16xf32>
    %cst_90 = arith.constant 2.000000e-01 : f32
    %275 = vector.broadcast %cst_90 : f32 to vector<16x16xf32>
    %276 = arith.mulf %275, %272 : vector<16x16xf32>
    %277 = arith.select %274, %272, %276 : vector<16x16xi1>, vector<16x16xf32>
    %cst_91 = arith.constant -1.000000e+30 : f32
    %278 = vector.broadcast %cst_91 : f32 to vector<16x16xf32>
    %279 = arith.select %4, %277, %278 : vector<16x16xi1>, vector<16x16xf32>
    %cst_92 = arith.constant dense<0xFF800000> : vector<16xf32>
    %280 = vector.multi_reduction <maximumf>, %279, %cst_92 [1] : vector<16x16xf32> to vector<16xf32>
    %281 = vector.shape_cast %280 : vector<16xf32> to vector<16x1xf32>
    %cst_93 = arith.constant -1.000000e+20 : f32
    %282 = vector.broadcast %cst_93 : f32 to vector<16x1xf32>
    %283 = arith.maximumf %281, %282 : vector<16x1xf32>
    %284 = vector.broadcast %283 : vector<16x1xf32> to vector<16x16xf32>
    %285 = arith.subf %279, %284 : vector<16x16xf32>
    %286 = math.exp %285 : vector<16x16xf32>
    %cst_94 = arith.constant dense<0.000000e+00> : vector<16xf32>
    %287 = vector.multi_reduction <add>, %286, %cst_94 [1] : vector<16x16xf32> to vector<16xf32>
    %288 = vector.shape_cast %287 : vector<16xf32> to vector<16x1xf32>
    %cst_95 = arith.constant 9.99999996E-13 : f32
    %289 = vector.broadcast %cst_95 : f32 to vector<16x1xf32>
    %290 = arith.maximumf %288, %289 : vector<16x1xf32>
    %291 = vector.broadcast %290 : vector<16x1xf32> to vector<16x16xf32>
    %292 = arith.divf %286, %291 : vector<16x16xf32>
    %293 = vector.extract_strided_slice %204 {offsets = [0, 3], sizes = [16, 1], strides = [1, 1]} : vector<16x4xf32> to vector<16x1xf32>
    %294 = vector.extract_strided_slice %202 {offsets = [3, 0], sizes = [1, 16], strides = [1, 1]} : vector<4x16xf32> to vector<1x16xf32>
    %295 = vector.broadcast %293 : vector<16x1xf32> to vector<16x16xf32>
    %296 = vector.broadcast %294 : vector<1x16xf32> to vector<16x16xf32>
    %297 = arith.addf %295, %296 : vector<16x16xf32>
    %cst_96 = arith.constant 0.000000e+00 : f32
    %298 = vector.broadcast %cst_96 : f32 to vector<16x16xf32>
    %299 = arith.cmpf ogt, %297, %298 : vector<16x16xf32>
    %cst_97 = arith.constant 2.000000e-01 : f32
    %300 = vector.broadcast %cst_97 : f32 to vector<16x16xf32>
    %301 = arith.mulf %300, %297 : vector<16x16xf32>
    %302 = arith.select %299, %297, %301 : vector<16x16xi1>, vector<16x16xf32>
    %cst_98 = arith.constant -1.000000e+30 : f32
    %303 = vector.broadcast %cst_98 : f32 to vector<16x16xf32>
    %304 = arith.select %8, %302, %303 : vector<16x16xi1>, vector<16x16xf32>
    %cst_99 = arith.constant dense<0xFF800000> : vector<16xf32>
    %305 = vector.multi_reduction <maximumf>, %304, %cst_99 [1] : vector<16x16xf32> to vector<16xf32>
    %306 = vector.shape_cast %305 : vector<16xf32> to vector<16x1xf32>
    %cst_100 = arith.constant -1.000000e+20 : f32
    %307 = vector.broadcast %cst_100 : f32 to vector<16x1xf32>
    %308 = arith.maximumf %306, %307 : vector<16x1xf32>
    %309 = vector.broadcast %308 : vector<16x1xf32> to vector<16x16xf32>
    %310 = arith.subf %304, %309 : vector<16x16xf32>
    %311 = math.exp %310 : vector<16x16xf32>
    %cst_101 = arith.constant dense<0.000000e+00> : vector<16xf32>
    %312 = vector.multi_reduction <add>, %311, %cst_101 [1] : vector<16x16xf32> to vector<16xf32>
    %313 = vector.shape_cast %312 : vector<16xf32> to vector<16x1xf32>
    %cst_102 = arith.constant 9.99999996E-13 : f32
    %314 = vector.broadcast %cst_102 : f32 to vector<16x1xf32>
    %315 = arith.maximumf %313, %314 : vector<16x1xf32>
    %316 = vector.broadcast %315 : vector<16x1xf32> to vector<16x16xf32>
    %317 = arith.divf %311, %316 : vector<16x16xf32>
    %318 = tpu.concatenate %292, %317 in 0 : vector<16x16xf32>, vector<16x16xf32> -> vector<32x16xf32>
    %c8_i32_103 = arith.constant 8 : i32
    %319 = vector.broadcast %c8_i32_103 : i32 to vector<1x16xi32>
    %320 = arith.cmpi sge, %200, %319 : vector<1x16xi32>
    %c16_i32_104 = arith.constant 16 : i32
    %321 = vector.broadcast %c16_i32_104 : i32 to vector<1x16xi32>
    %322 = arith.cmpi slt, %200, %321 : vector<1x16xi32>
    %323 = arith.andi %320, %322 : vector<1x16xi1>
    %324 = arith.extui %323 : vector<1x16xi1> to vector<1x16xi32>
    %325 = arith.sitofp %324 : vector<1x16xi32> to vector<1x16xf32>
    %326 = vector.broadcast %325 : vector<1x16xf32> to vector<16x16xf32>
    %327 = arith.mulf %199, %326 : vector<16x16xf32>
    %328 = arith.truncf %327 : vector<16x16xf32> to vector<16x16xbf16>
    %329 = arith.truncf %318 : vector<32x16xf32> to vector<32x16xbf16>
    %cst_105 = arith.constant dense<0.000000e+00> : vector<32x16xf32>
    %330 = tpu.matmul %329, %328, %cst_105 {dimension_numbers = #tpu.dot_dimension_numbers<[1], [0], [0], [1], [0, 0, 1, 1], [], []>} : vector<32x16xbf16>, vector<16x16xbf16>, vector<32x16xf32> -> vector<32x16xf32>
    %331 = arith.addf %267, %330 : vector<32x16xf32>
    %cst_106 = arith.constant 0.000000e+00 : f32
    %332 = vector.broadcast %cst_106 : f32 to vector<32x16xf32>
    %333 = arith.maximumf %331, %332 : vector<32x16xf32>
    %334 = arith.truncf %333 : vector<32x16xf32> to vector<32x16xbf16>
    %c0_107 = arith.constant 0 : index
    %c0_108 = arith.constant 0 : index
    %335 = vector.load %arg13[%c0_107, %c0_108] : memref<16x16xf32, #tpu.memory_space<vmem>>, vector<16x16xf32>
    %336 = arith.truncf %335 : vector<16x16xf32> to vector<16x16xbf16>
    %cst_109 = arith.constant dense<0.000000e+00> : vector<32x16xf32>
    %337 = tpu.matmul %334, %336, %cst_109 {dimension_numbers = #tpu.dot_dimension_numbers<[1], [0], [0], [1], [0, 0, 1, 1], [], []>} : vector<32x16xbf16>, vector<16x16xbf16>, vector<32x16xf32> -> vector<32x16xf32>
    %c0_110 = arith.constant 0 : index
    %c0_111 = arith.constant 0 : index
    %338 = vector.load %arg14[%c0_110, %c0_111] : memref<1x16xf32, #tpu.memory_space<vmem>>, vector<1x16xf32>
    %339 = vector.broadcast %338 : vector<1x16xf32> to vector<32x16xf32>
    %340 = arith.addf %337, %339 : vector<32x16xf32>
    %341 = math.tanh %340 : vector<32x16xf32>
    %c0_112 = arith.constant 0 : index
    %c0_113 = arith.constant 0 : index
    %342 = vector.load %arg15[%c0_112, %c0_113] : memref<1x16xf32, #tpu.memory_space<vmem>>, vector<1x16xf32>
    %343 = vector.extract_strided_slice %341 {offsets = [0, 0], sizes = [16, 16], strides = [1, 1]} : vector<32x16xf32> to vector<16x16xf32>
    %cst_114 = arith.constant dense<0.000000e+00> : vector<16xf32>
    %344 = vector.multi_reduction <add>, %343, %cst_114 [0] : vector<16x16xf32> to vector<16xf32>
    %345 = vector.shape_cast %344 : vector<16xf32> to vector<1x16xf32>
    %cst_115 = arith.constant 1.600000e+01 : f32
    %346 = vector.broadcast %cst_115 : f32 to vector<1x16xf32>
    %347 = arith.divf %345, %346 : vector<1x16xf32>
    %348 = arith.mulf %342, %347 : vector<1x16xf32>
    %cst_116 = arith.constant dense<0.000000e+00> : vector<1xf32>
    %349 = vector.multi_reduction <add>, %348, %cst_116 [1] : vector<1x16xf32> to vector<1xf32>
    %350 = vector.shape_cast %349 : vector<1xf32> to vector<1x1xf32>
    %351 = vector.extract_strided_slice %341 {offsets = [16, 0], sizes = [16, 16], strides = [1, 1]} : vector<32x16xf32> to vector<16x16xf32>
    %cst_117 = arith.constant dense<0.000000e+00> : vector<16xf32>
    %352 = vector.multi_reduction <add>, %351, %cst_117 [0] : vector<16x16xf32> to vector<16xf32>
    %353 = vector.shape_cast %352 : vector<16xf32> to vector<1x16xf32>
    %cst_118 = arith.constant 1.600000e+01 : f32
    %354 = vector.broadcast %cst_118 : f32 to vector<1x16xf32>
    %355 = arith.divf %353, %354 : vector<1x16xf32>
    %356 = arith.mulf %342, %355 : vector<1x16xf32>
    %cst_119 = arith.constant dense<0.000000e+00> : vector<1xf32>
    %357 = vector.multi_reduction <add>, %356, %cst_119 [1] : vector<1x16xf32> to vector<1xf32>
    %358 = vector.shape_cast %357 : vector<1xf32> to vector<1x1xf32>
    %359 = arith.maximumf %350, %358 : vector<1x1xf32>
    %360 = arith.subf %350, %359 : vector<1x1xf32>
    %361 = math.exp %360 : vector<1x1xf32>
    %362 = arith.subf %358, %359 : vector<1x1xf32>
    %363 = math.exp %362 : vector<1x1xf32>
    %364 = arith.addf %361, %363 : vector<1x1xf32>
    %cst_120 = arith.constant 1.000000e+00 : f32
    %365 = vector.broadcast %cst_120 : f32 to vector<1x1xf32>
    %366 = arith.divf %365, %364 : vector<1x1xf32>
    %367 = arith.mulf %361, %366 : vector<1x1xf32>
    %368 = vector.extract_strided_slice %333 {offsets = [0, 0], sizes = [16, 16], strides = [1, 1]} : vector<32x16xf32> to vector<16x16xf32>
    %369 = vector.broadcast %367 : vector<1x1xf32> to vector<16x16xf32>
    %370 = arith.mulf %369, %368 : vector<16x16xf32>
    %371 = arith.mulf %363, %366 : vector<1x1xf32>
    %372 = vector.extract_strided_slice %333 {offsets = [16, 0], sizes = [16, 16], strides = [1, 1]} : vector<32x16xf32> to vector<16x16xf32>
    %373 = vector.broadcast %371 : vector<1x1xf32> to vector<16x16xf32>
    %374 = arith.mulf %373, %372 : vector<16x16xf32>
    %375 = arith.addf %370, %374 : vector<16x16xf32>
    %376 = arith.truncf %375 : vector<16x16xf32> to vector<16x16xbf16>
    %c0_121 = arith.constant 0 : index
    %c0_122 = arith.constant 0 : index
    %377 = vector.load %arg16[%c0_121, %c0_122] : memref<16x32xf32, #tpu.memory_space<vmem>>, vector<16x32xf32>
    %378 = arith.truncf %377 : vector<16x32xf32> to vector<16x32xbf16>
    %cst_123 = arith.constant dense<0.000000e+00> : vector<16x32xf32>
    %379 = tpu.matmul %376, %378, %cst_123 {dimension_numbers = #tpu.dot_dimension_numbers<[1], [0], [0], [1], [0, 0, 1, 1], [], []>} : vector<16x16xbf16>, vector<16x32xbf16>, vector<16x32xf32> -> vector<16x32xf32>
    %c0_124 = arith.constant 0 : index
    %c0_125 = arith.constant 0 : index
    %380 = vector.load %arg17[%c0_124, %c0_125] : memref<1x32xf32, #tpu.memory_space<vmem>>, vector<1x32xf32>
    %381 = vector.broadcast %380 : vector<1x32xf32> to vector<16x32xf32>
    %382 = arith.addf %379, %381 : vector<16x32xf32>
    %383 = arith.truncf %382 : vector<16x32xf32> to vector<16x32xbf16>
    %c0_126 = arith.constant 0 : index
    %c0_127 = arith.constant 0 : index
    %384 = vector.load %arg18[%c0_126, %c0_127] : memref<32x16xf32, #tpu.memory_space<vmem>>, vector<32x16xf32>
    %385 = arith.truncf %384 : vector<32x16xf32> to vector<32x16xbf16>
    %cst_128 = arith.constant dense<0.000000e+00> : vector<16x16xf32>
    %386 = tpu.matmul %383, %385, %cst_128 {dimension_numbers = #tpu.dot_dimension_numbers<[1], [0], [0], [1], [0, 0, 1, 1], [], []>} : vector<16x32xbf16>, vector<32x16xbf16>, vector<16x16xf32> -> vector<16x16xf32>
    %c0_129 = arith.constant 0 : index
    %c0_130 = arith.constant 0 : index
    %387 = vector.load %arg19[%c0_129, %c0_130] : memref<1x16xf32, #tpu.memory_space<vmem>>, vector<1x16xf32>
    %388 = vector.broadcast %387 : vector<1x16xf32> to vector<16x16xf32>
    %389 = arith.addf %386, %388 : vector<16x16xf32>
    %390 = arith.truncf %389 : vector<16x16xf32> to vector<16x16xbf16>
    %c0_131 = arith.constant 0 : index
    %c0_132 = arith.constant 0 : index
    %391 = vector.load %arg20[%c0_131, %c0_132] : memref<16x128xf32, #tpu.memory_space<vmem>>, vector<16x128xf32>
    %392 = arith.truncf %391 : vector<16x128xf32> to vector<16x128xbf16>
    %cst_133 = arith.constant dense<0.000000e+00> : vector<16x128xf32>
    %393 = tpu.matmul %390, %392, %cst_133 {dimension_numbers = #tpu.dot_dimension_numbers<[1], [0], [0], [1], [0, 0, 1, 1], [], []>} : vector<16x16xbf16>, vector<16x128xbf16>, vector<16x128xf32> -> vector<16x128xf32>
    %c0_134 = arith.constant 0 : index
    %c0_135 = arith.constant 0 : index
    %394 = vector.load %arg21[%c0_134, %c0_135] : memref<1x128xf32, #tpu.memory_space<vmem>>, vector<1x128xf32>
    %395 = vector.broadcast %394 : vector<1x128xf32> to vector<16x128xf32>
    %396 = arith.addf %393, %395 : vector<16x128xf32>
    %397 = arith.negf %396 : vector<16x128xf32>
    %398 = math.exp %397 : vector<16x128xf32>
    %cst_136 = arith.constant 1.000000e+00 : f32
    %399 = vector.broadcast %cst_136 : f32 to vector<16x128xf32>
    %400 = arith.addf %399, %398 : vector<16x128xf32>
    %401 = arith.divf %399, %400 : vector<16x128xf32>
    %c0_137 = arith.constant 0 : index
    %c0_138 = arith.constant 0 : index
    %402 = vector.load %arg22[%c0_137, %c0_138] : memref<16x128xf32, #tpu.memory_space<vmem>>, vector<16x128xf32>
    tpu.vector_store %arg22[%c0_137, %c0_138], %401 {strides = array<i32>} : memref<16x128xf32, #tpu.memory_space<vmem>>, vector<16x128xf32>,
    return
  }
}

</mosaic_0001>

<llo_original>
// kernel: han_forward.1
$region0: #{han_forward.1}
  #allocation0 [shape = 'u32[]', space=smem, size = 0x4, offset = 0x4, fixed_abs, tag = 'smem constant byte address 0x4 - core index']
  #allocation1 [shape = 'u32[144,128]{1,0:T(1,128)}', space=vmem, size = 0x12000, scoped, tag = 'internal scratch']
  %s0 = inlined_call_operand.vmem [shape: f32[16,8], index: 0, kind: input, shape index: {}]
  %s1 = inlined_call_operand.vmem [shape: s8[2,16,16], index: 1, kind: input, shape index: {}]
  %s2 = inlined_call_operand.vmem [shape: f32[8,16], index: 2, kind: input, shape index: {}]
  %s3 = inlined_call_operand.vmem [shape: f32[1,16], index: 3, kind: input, shape index: {}]
  %s4 = inlined_call_operand.vmem [shape: f32[4,16], index: 4, kind: input, shape index: {}]
  %s5 = inlined_call_operand.vmem [shape: f32[4,16], index: 5, kind: input, shape index: {}]
  %s6 = inlined_call_operand.vmem [shape: f32[16,16], index: 6, kind: input, shape index: {}]
  %s7 = inlined_call_operand.vmem [shape: f32[1,16], index: 7, kind: input, shape index: {}]
  %s8 = inlined_call_operand.vmem [shape: f32[1,16], index: 8, kind: input, shape index: {}]
  %s9 = inlined_call_operand.vmem [shape: f32[16,16], index: 9, kind: input, shape index: {}]
  %s10 = inlined_call_operand.vmem [shape: f32[1,16], index: 10, kind: input, shape index: {}]
  %s11 = inlined_call_operand.vmem [shape: f32[4,16], index: 11, kind: input, shape index: {}]
  %s12 = inlined_call_operand.vmem [shape: f32[4,16], index: 12, kind: input, shape index: {}]
  %s13 = inlined_call_operand.vmem [shape: f32[16,16], index: 13, kind: input, shape index: {}]
  %s14 = inlined_call_operand.vmem [shape: f32[1,16], index: 14, kind: input, shape index: {}]
  %s15 = inlined_call_operand.vmem [shape: f32[1,16], index: 15, kind: input, shape index: {}]
  %s16 = inlined_call_operand.vmem [shape: f32[16,32], index: 16, kind: input, shape index: {}]
  %s17 = inlined_call_operand.vmem [shape: f32[1,32], index: 17, kind: input, shape index: {}]
  %s18 = inlined_call_operand.vmem [shape: f32[32,16], index: 18, kind: input, shape index: {}]
  %s19 = inlined_call_operand.vmem [shape: f32[1,16], index: 19, kind: input, shape index: {}]
  %s20 = inlined_call_operand.vmem [shape: f32[16,128], index: 20, kind: input, shape index: {}]
  %s21 = inlined_call_operand.vmem [shape: f32[1,128], index: 21, kind: input, shape index: {}]
  %s22 = inlined_call_operand.vmem [shape: f32[16,128], index: 22, kind: output, shape index: {}]
  %s23 = sld [smem:[#allocation0]]
  $region98: #{han_forward.1} parent=0
    _
  %s25 = ssub.s32 1, %s23
  %s26 = scalar_select 0, %s25, %s23
  // Predicated region
  $region2: #{han_forward.1} parent=0 // pred_check
    _
  $region3: #{han_forward.1} parent=0 // pred_check_branch
    %28 = sbr.rel (0) target = $region5
  $region4: #{han_forward.1} parent=0 // pred_region
    _
  $region5: #{han_forward.1} parent=0 // pred_fallthru
    _
  // Predicated region
  $region6: #{han_forward.1} parent=0 // pred_check
    _
  $region7: #{han_forward.1} parent=0 // pred_check_branch
    %30 = sbr.rel (0) target = $region9
  $region8: #{han_forward.1} parent=0 // pred_region
    _
  $region9: #{han_forward.1} parent=0 // pred_fallthru
    _
  // Predicated region
  $region10: #{han_forward.1} parent=0 // pred_check
    _
  $region11: #{han_forward.1} parent=0 // pred_check_branch
    %32 = sbr.rel (0) target = $region13
  $region12: #{han_forward.1} parent=0 // pred_region
    _
  $region13: #{han_forward.1} parent=0 // pred_fallthru
    _
  // Predicated region
  $region14: #{han_forward.1} parent=0 // pred_check
    _
  $region15: #{han_forward.1} parent=0 // pred_check_branch
    %34 = sbr.rel (0) target = $region17
  $region16: #{han_forward.1} parent=0 // pred_region
    _
  $region17: #{han_forward.1} parent=0 // pred_fallthru
    _
  // Predicated region
  $region18: #{han_forward.1} parent=0 // pred_check
    _
  $region19: #{han_forward.1} parent=0 // pred_check_branch
    %36 = sbr.rel (0) target = $region21
  $region20: #{han_forward.1} parent=0 // pred_region
    _
  $region21: #{han_forward.1} parent=0 // pred_fallthru
    _
  // Predicated region
  $region22: #{han_forward.1} parent=0 // pred_check
    _
  $region23: #{han_forward.1} parent=0 // pred_check_branch
    %38 = sbr.rel (0) target = $region25
  $region24: #{han_forward.1} parent=0 // pred_region
    _
  $region25: #{han_forward.1} parent=0 // pred_fallthru
    _
  // Predicated region
  $region26: #{han_forward.1} parent=0 // pred_check
    _
  $region27: #{han_forward.1} parent=0 // pred_check_branch
    %40 = sbr.rel (0) target = $region29
  $region28: #{han_forward.1} parent=0 // pred_region
    _
  $region29: #{han_forward.1} parent=0 // pred_fallthru
    _
  // Predicated region
  $region30: #{han_forward.1} parent=0 // pred_check
    _
  $region31: #{han_forward.1} parent=0 // pred_check_branch
    %42 = sbr.rel (0) target = $region33
  $region32: #{han_forward.1} parent=0 // pred_region
    _
  $region33: #{han_forward.1} parent=0 // pred_fallthru
    _
  // Predicated region
  $region34: #{han_forward.1} parent=0 // pred_check
    _
  $region35: #{han_forward.1} parent=0 // pred_check_branch
    %44 = sbr.rel (0) target = $region37
  $region36: #{han_forward.1} parent=0 // pred_region
    _
  $region37: #{han_forward.1} parent=0 // pred_fallthru
    _
  // Predicated region
  $region38: #{han_forward.1} parent=0 // pred_check
    _
  $region39: #{han_forward.1} parent=0 // pred_check_branch
    %46 = sbr.rel (0) target = $region41
  $region40: #{han_forward.1} parent=0 // pred_region
    _
  $region41: #{han_forward.1} parent=0 // pred_fallthru
    _
  // Predicated region
  $region42: #{han_forward.1} parent=0 // pred_check
    _
  $region43: #{han_forward.1} parent=0 // pred_check_branch
    %48 = sbr.rel (0) target = $region45
  $region44: #{han_forward.1} parent=0 // pred_region
    _
  $region45: #{han_forward.1} parent=0 // pred_fallthru
    _
  // Predicated region
  $region46: #{han_forward.1} parent=0 // pred_check
    _
  $region47: #{han_forward.1} parent=0 // pred_check_branch
    %50 = sbr.rel (0) target = $region49
  $region48: #{han_forward.1} parent=0 // pred_region
    _
  $region49: #{han_forward.1} parent=0 // pred_fallthru
    _
  // Predicated region
  $region50: #{han_forward.1} parent=0 // pred_check
    _
  $region51: #{han_forward.1} parent=0 // pred_check_branch
    %52 = sbr.rel (0) target = $region53
  $region52: #{han_forward.1} parent=0 // pred_region
    _
  $region53: #{han_forward.1} parent=0 // pred_fallthru
    _
  // Predicated region
  $region54: #{han_forward.1} parent=0 // pred_check
    _
  $region55: #{han_forward.1} parent=0 // pred_check_branch
    %54 = sbr.rel (0) target = $region57
  $region56: #{han_forward.1} parent=0 // pred_region
    _
  $region57: #{han_forward.1} parent=0 // pred_fallthru
    _
  // Predicated region
  $region58: #{han_forward.1} parent=0 // pred_check
    _
  $region59: #{han_forward.1} parent=0 // pred_check_branch
    %56 = sbr.rel (0) target = $region61
  $region60: #{han_forward.1} parent=0 // pred_region
    _
  $region61: #{han_forward.1} parent=0 // pred_fallthru
    _
  // Predicated region
  $region62: #{han_forward.1} parent=0 // pred_check
    _
  $region63: #{han_forward.1} parent=0 // pred_check_branch
    %58 = sbr.rel (0) target = $region65
  $region64: #{han_forward.1} parent=0 // pred_region
    _
  $region65: #{han_forward.1} parent=0 // pred_fallthru
    _
  // Predicated region
  $region66: #{han_forward.1} parent=0 // pred_check
    _
  $region67: #{han_forward.1} parent=0 // pred_check_branch
    %60 = sbr.rel (0) target = $region69
  $region68: #{han_forward.1} parent=0 // pred_region
    _
  $region69: #{han_forward.1} parent=0 // pred_fallthru
    _
  // Predicated region
  $region70: #{han_forward.1} parent=0 // pred_check
    _
  $region71: #{han_forward.1} parent=0 // pred_check_branch
    %62 = sbr.rel (0) target = $region73
  $region72: #{han_forward.1} parent=0 // pred_region
    _
  $region73: #{han_forward.1} parent=0 // pred_fallthru
    _
  // Predicated region
  $region74: #{han_forward.1} parent=0 // pred_check
    _
  $region75: #{han_forward.1} parent=0 // pred_check_branch
    %64 = sbr.rel (0) target = $region77
  $region76: #{han_forward.1} parent=0 // pred_region
    _
  $region77: #{han_forward.1} parent=0 // pred_fallthru
    _
  // Predicated region
  $region78: #{han_forward.1} parent=0 // pred_check
    _
  $region79: #{han_forward.1} parent=0 // pred_check_branch
    %66 = sbr.rel (0) target = $region81
  $region80: #{han_forward.1} parent=0 // pred_region
    _
  $region81: #{han_forward.1} parent=0 // pred_fallthru
    _
  // Predicated region
  $region82: #{han_forward.1} parent=0 // pred_check
    _
  $region83: #{han_forward.1} parent=0 // pred_check_branch
    %68 = sbr.rel (0) target = $region85
  $region84: #{han_forward.1} parent=0 // pred_region
    _
  $region85: #{han_forward.1} parent=0 // pred_fallthru
    _
  // Predicated region
  $region86: #{han_forward.1} parent=0 // pred_check
    _
  $region87: #{han_forward.1} parent=0 // pred_check_branch
    %70 = sbr.rel (0) target = $region89
  $region88: #{han_forward.1} parent=0 // pred_region
    _
  $region89: #{han_forward.1} parent=0 // pred_fallthru
    _
  %v74 = vld [vmem:[%s1] sm:$0x3]
  %v75 = vld [vmem:[%s1 + $0x2] sm:$0x3]
  %v76 = vld [vmem:[%s1 + $0x4] sm:$0x3]
  %v77 = vld [vmem:[%s1 + $0x6] sm:$0x3]
  %vm78 = vnez %v74
  %vm79 = vnez %v75
  %vm80 = vnez %v76
  %vm81 = vnez %v77
  %v82 = vld [vmem:[%s0] sm:$0xff]
  %v83 = vld [vmem:[%s0 + $0x8] sm:$0xff]
  %v84 = vpack.c.bf16 %v83, %v82
  %v85 = vld [vmem:[%s2] sm:$0xff]
  %v86 = vpack.c.bf16 %v85, %v85
  %v87 = vld [vmem:[%s3] sm:$0x1]
  %v89 = vlaneseq
  %v90 = vshrl.u32 %v89, 7
  %v91 = vsub.s32 0, %v90
  %v92 = vrot.slane %v87, %v91
  %vm94 = vcmask 64512
  %v96 = vsel %vm94, %v84, 0
  %vm98 = vcmask 1043456
  %v100 = vsel %vm98, %v86, 0
  %102 = vmatprep.subr.bf16.mxu0 0
  %103 = vmatpush1.bf16.msra.mxu0 0
  %104 = vmatprep.subr.bf16.mxu0 0
  %105 = vmatpush1.bf16.msra.mxu0 0
  %106 = vmatprep.subr.bf16.mxu0 0
  %107 = vmatpush1.bf16.msra.mxu0 0
  %108 = vmatprep.subr.bf16.mxu0 0
  %109 = vmatpush1.bf16.msra.mxu0 0
  %110 = vmatprep.subr.bf16.mxu0 0
  %111 = vmatpush1.bf16.msra.mxu0 0
  %112 = vmatprep.subr.bf16.mxu0 0
  %113 = vmatpush1.bf16.msra.mxu0 0
  %114 = vmatprep.subr.bf16.mxu0 0
  %115 = vmatpush1.bf16.msra.mxu0 0
  %116 = vmatprep.subr.bf16.mxu0 0
  %117 = vmatpush1.bf16.msra.mxu0 %v100
  %118 = vmatprep.subr.bf16.mxu0 0
  %119 = vmatpush2.bf16.msra.mxu0 0
  %120 = vmatprep.subr.bf16.mxu0 0
  %121 = vmatpush2.bf16.msra.mxu0 0
  %122 = vmatprep.subr.bf16.mxu0 0
  %123 = vmatpush2.bf16.msra.mxu0 0
  %124 = vmatprep.subr.bf16.mxu0 0
  %125 = vmatpush2.bf16.msra.mxu0 0
  %126 = vmatprep.subr.bf16.mxu0 0
  %127 = vmatpush2.bf16.msra.mxu0 0
  %128 = vmatprep.subr.bf16.mxu0 0
  %129 = vmatpush2.bf16.msra.mxu0 0
  %130 = vmatprep.subr.bf16.mxu0 0
  %131 = vmatpush2.bf16.msra.mxu0 0
  %132 = vmatprep.subr.bf16.mxu0 0
  %133 = vmatpush2.bf16.msra.mxu0 0
  %134 = vmatprep.mubr.bf16.mxu0 0
  %135 = vmatmul.mubr.bf16.gmra.mxu0 %v96
  %v136 = vpop.f32.mrf.mxu0
  %v137 = vadd.f32 %v92, %v136
  %v138 = vpop.f32.mrf.mxu0
  %v139 = vpop.f32.mrf.mxu0
  %v140 = vadd.f32 %v92, %v139
  %v141 = vpop.f32.mrf.mxu0
  %142 = vdwg.mxu0
  %v143 = vlaneseq
  %v144 = vand.u32 %v143, 127
  %v145 = vld [vmem:[%s4] sm:$0xf]
  %vm146 = vcmask 130048
  %v148 = vsel %vm146, %v145, 0
  %v151 = vsel %vm146, %v137, 0
  %v154 = vsel %vm146, %v140, 0
  %156 = vmatprep.subr.mxu0 0.0
  %157 = vmatpush1.xpose.msra.mxu0 0.0
  %158 = vmatprep.subr.mxu0 0.0
  %159 = vmatpush1.xpose.msra.mxu0 0.0
  %160 = vmatprep.subr.mxu0 0.0
  %161 = vmatpush1.xpose.msra.mxu0 0.0
  %162 = vmatprep.subr.mxu0 0.0
  %163 = vmatpush1.xpose.msra.mxu0 0.0
  %164 = vmatprep.subr.mxu0 0.0
  %165 = vmatpush1.xpose.msra.mxu0 0.0
  %166 = vmatprep.subr.mxu0 0.0
  %167 = vmatpush1.xpose.msra.mxu0 0.0
  %168 = vmatprep.subr.mxu0 0.0
  %169 = vmatpush1.xpose.msra.mxu0 0.0
  %170 = vmatprep.subr.mxu0 0.0
  %171 = vmatpush1.xpose.msra.mxu0 0.0
  %172 = vmatprep.subr.mxu0 0.0
  %173 = vmatpush1.xpose.msra.mxu0 0.0
  %174 = vmatprep.subr.mxu0 0.0
  %175 = vmatpush1.xpose.msra.mxu0 0.0
  %176 = vmatprep.subr.mxu0 0.0
  %177 = vmatpush1.xpose.msra.mxu0 0.0
  %178 = vmatprep.subr.mxu0 0.0
  %179 = vmatpush1.xpose.msra.mxu0 0.0
  %180 = vmatprep.subr.mxu0 0.0
  %181 = vmatpush1.xpose.msra.mxu0 0.0
  %182 = vmatprep.subr.mxu0 0.0
  %183 = vmatpush1.xpose.msra.mxu0 0.0
  %184 = vmatprep.subr.mxu0 0.0
  %185 = vmatpush1.xpose.msra.mxu0 %v154
  %186 = vmatprep.subr.mxu0 0.0
  %187 = vmatpush1.xpose.msra.mxu0 %v151
  %188 = vmatprep.subr.mxu0 0.0
  %189 = vmatpush2.xpose.msra.mxu0 0.0
  %190 = vmatprep.subr.mxu0 0.0
  %191 = vmatpush2.xpose.msra.mxu0 0.0
  %192 = vmatprep.subr.mxu0 0.0
  %193 = vmatpush2.xpose.msra.mxu0 0.0
  %194 = vmatprep.subr.mxu0 0.0
  %195 = vmatpush2.xpose.msra.mxu0 0.0
  %196 = vmatprep.subr.mxu0 0.0
  %197 = vmatpush2.xpose.msra.mxu0 0.0
  %198 = vmatprep.subr.mxu0 0.0
  %199 = vmatpush2.xpose.msra.mxu0 0.0
  %200 = vmatprep.subr.mxu0 0.0
  %201 = vmatpush2.xpose.msra.mxu0 0.0
  %202 = vmatprep.subr.mxu0 0.0
  %203 = vmatpush2.xpose.msra.mxu0 0.0
  %204 = vmatprep.subr.mxu0 0.0
  %205 = vmatpush2.xpose.msra.mxu0 0.0
  %206 = vmatprep.subr.mxu0 0.0
  %207 = vmatpush2.xpose.msra.mxu0 0.0
  %208 = vmatprep.subr.mxu0 0.0
  %209 = vmatpush2.xpose.msra.mxu0 0.0
  %210 = vmatprep.subr.mxu0 0.0
  %211 = vmatpush2.xpose.msra.mxu0 0.0
  %212 = vmatprep.subr.mxu0 0.0
  %213 = vmatpush2.xpose.msra.mxu0 0.0
  %214 = vmatprep.subr.mxu0 0.0
  %215 = vmatpush2.xpose.msra.mxu0 0.0
  %216 = vmatprep.subr.mxu0 0.0
  %217 = vmatpush2.xpose.msra.mxu0 0.0
  %218 = vmatprep.subr.mxu0 0.0
  %219 = vmatpush2.xpose.msra.mxu0 0.0
  %220 = vmatprep.mubr.f32.mxu0 0.0
  %221 = vmatmul.mubr.f32.gmra.mxu0 %v148
  %v222 = vpop.f32.mrf.mxu0
  %v223 = vadd.f32 0.0, %v222
  %v224 = vpop.f32.mrf.mxu0
  %225 = vdwg.mxu0
  %v226 = vld [vmem:[%s5] sm:$0xf]
  %v228 = vsel %vm146, %v226, 0
  %230 = vmatprep.subr.mxu0 0.0
  %231 = vmatpush1.xpose.msra.mxu0 0.0
  %232 = vmatprep.subr.mxu0 0.0
  %233 = vmatpush1.xpose.msra.mxu0 0.0
  %234 = vmatprep.subr.mxu0 0.0
  %235 = vmatpush1.xpose.msra.mxu0 0.0
  %236 = vmatprep.subr.mxu0 0.0
  %237 = vmatpush1.xpose.msra.mxu0 0.0
  %238 = vmatprep.subr.mxu0 0.0
  %239 = vmatpush1.xpose.msra.mxu0 0.0
  %240 = vmatprep.subr.mxu0 0.0
  %241 = vmatpush1.xpose.msra.mxu0 0.0
  %242 = vmatprep.subr.mxu0 0.0
  %243 = vmatpush1.xpose.msra.mxu0 0.0
  %244 = vmatprep.subr.mxu0 0.0
  %245 = vmatpush1.xpose.msra.mxu0 0.0
  %246 = vmatprep.subr.mxu0 0.0
  %247 = vmatpush1.xpose.msra.mxu0 0.0
  %248 = vmatprep.subr.mxu0 0.0
  %249 = vmatpush1.xpose.msra.mxu0 0.0
  %250 = vmatprep.subr.mxu0 0.0
  %251 = vmatpush1.xpose.msra.mxu0 0.0
  %252 = vmatprep.subr.mxu0 0.0
  %253 = vmatpush1.xpose.msra.mxu0 0.0
  %254 = vmatprep.subr.mxu0 0.0
  %255 = vmatpush1.xpose.msra.mxu0 0.0
  %256 = vmatprep.subr.mxu0 0.0
  %257 = vmatpush1.xpose.msra.mxu0 0.0
  %258 = vmatprep.subr.mxu0 0.0
  %259 = vmatpush1.xpose.msra.mxu0 0.0
  %260 = vmatprep.subr.mxu0 0.0
  %261 = vmatpush1.xpose.msra.mxu0 %v228
  %262 = vmatprep.subr.mxu0 0.0
  %263 = vmatpush2.xpose.msra.mxu0 0.0
  %264 = vmatprep.subr.mxu0 0.0
  %265 = vmatpush2.xpose.msra.mxu0 0.0
  %266 = vmatprep.subr.mxu0 0.0
  %267 = vmatpush2.xpose.msra.mxu0 0.0
  %268 = vmatprep.subr.mxu0 0.0
  %269 = vmatpush2.xpose.msra.mxu0 0.0
  %270 = vmatprep.subr.mxu0 0.0
  %271 = vmatpush2.xpose.msra.mxu0 0.0
  %272 = vmatprep.subr.mxu0 0.0
  %273 = vmatpush2.xpose.msra.mxu0 0.0
  %274 = vmatprep.subr.mxu0 0.0
  %275 = vmatpush2.xpose.msra.mxu0 0.0
  %276 = vmatprep.subr.mxu0 0.0
  %277 = vmatpush2.xpose.msra.mxu0 0.0
  %278 = vmatprep.subr.mxu0 0.0
  %279 = vmatpush2.xpose.msra.mxu0 0.0
  %280 = vmatprep.subr.mxu0 0.0
  %281 = vmatpush2.xpose.msra.mxu0 0.0
  %282 = vmatprep.subr.mxu0 0.0
  %283 = vmatpush2.xpose.msra.mxu0 0.0
  %284 = vmatprep.subr.mxu0 0.0
  %285 = vmatpush2.xpose.msra.mxu0 0.0
  %286 = vmatprep.subr.mxu0 0.0
  %287 = vmatpush2.xpose.msra.mxu0 0.0
  %288 = vmatprep.subr.mxu0 0.0
  %289 = vmatpush2.xpose.msra.mxu0 0.0
  %290 = vmatprep.subr.mxu0 0.0
  %291 = vmatpush2.xpose.msra.mxu0 0.0
  %292 = vmatprep.subr.mxu0 0.0
  %293 = vmatpush2.xpose.msra.mxu0 0.0
  %294 = vmatprep.mubr.f32.mxu0 0.0
  %295 = vmatmul.mubr.f32.gmra.mxu0 %v151
  %v296 = vpop.f32.mrf.mxu0
  %v297 = vadd.f32 0.0, %v296
  %v298 = vpop.f32.mrf.mxu0
  %299 = vmatprep.mubr.f32.mxu0 0.0
  %300 = vmatmul.mubr.f32.gmra.mxu0 %v154
  %v301 = vpop.f32.mrf.mxu0
  %v302 = vadd.f32 0.0, %v301
  %v303 = vpop.f32.mrf.mxu0
  %304 = vdwg.mxu0
  %306 = vset.pattern.permute.xlu0 0
  %307 = vperm.xlu0 %306, %v297
  %v308 = vpop.permute.xlu0 %307
  %311 = vset.pattern.permute.xlu0 0
  %312 = vperm.xlu0 %311, %v302
  %v313 = vpop.permute.xlu0 %312
  %v315 = vlaneseq
  %v316 = vshrl.u32 %v315, 7
  %v317 = vsub.s32 0, %v316
  %v318 = vrot.slane %v223, %v317
  %v319 = vadd.f32 %v308, %v318
  %v320 = vadd.f32 %v313, %v318
  %vm321 = vcmp.gt.f32.partialorder %v319, 0.0
  %vm322 = vcmp.gt.f32.partialorder %v320, 0.0
  %v323 = vmul.f32 %v319, 0.2
  %v324 = vmul.f32 %v320, 0.2
  %v325 = vsel %vm321, %v319, %v323
  %v326 = vsel %vm322, %v320, %v324
  %v327 = vsel %vm78, 16843009, 0
  %v328 = vsel %vm79, 16843009, 0
  %v329 = vunpack.c.0.s8 %v327
  %v330 = vunpack.c.0.s8 %v328
  %vm331 = vcmp.ne.s32.totalorder %v329, 0
  %vm332 = vcmp.ne.s32.totalorder %v330, 0
  %v333 = vsel %vm331, %v325, -1e+30
  %v334 = vsel %vm332, %v326, -1e+30
  %v335 = vsel %vm146, %v333, -inf
  %336 = vmax.xlane.f32.xlu0 %v335
  %v337 = vpop.xlane.xlu0 %336
  %v338 = vsel %vm146, %v334, -inf
  %339 = vmax.xlane.f32.xlu0 %v338
  %v340 = vpop.xlane.xlu0 %339
  %v341 = vmax.f32 %v337, -1e+20
  %v342 = vmax.f32 %v340, -1e+20
  %v343 = vsub.f32 %v333, %v341
  %v344 = vsub.f32 %v334, %v342
  %v345 = vmul.f32 %v343, 1.442695
  %v346 = vpow.pop %v345
  %v347 = vmul.f32 %v344, 1.442695
  %v348 = vpow.pop %v347
  %v349 = vsel %vm146, %v346, 0.0
  %350 = vadd.xlane.f32.xlu0 %v349
  %v351 = vpop.xlane.xlu0 %350
  %v352 = vsel %vm146, %v348, 0.0
  %353 = vadd.xlane.f32.xlu0 %v352
  %v354 = vpop.xlane.xlu0 %353
  %v355 = vmax.f32 %v351, 1e-12
  %v356 = vmax.f32 %v354, 1e-12
  %v357 = vrcp.pop %v355
  %v358 = vmul.f32 %v346, %v357
  %v359 = vrcp.pop %v356
  %v360 = vmul.f32 %v348, %v359
  %361 = vset.pattern.permute.xlu0 2
  %362 = vperm.xlu0 %361, %v297
  %v363 = vpop.permute.xlu0 %362
  %365 = vset.pattern.permute.xlu0 2
  %366 = vperm.xlu0 %365, %v302
  %v367 = vpop.permute.xlu0 %366
  %v369 = vlaneseq
  %v370 = vshrl.u32 %v369, 7
  %v371 = vsub.s32 2, %v370
  %v372 = vrot.slane %v223, %v371
  %v373 = vadd.f32 %v363, %v372
  %v374 = vadd.f32 %v367, %v372
  %vm375 = vcmp.gt.f32.partialorder %v373, 0.0
  %vm376 = vcmp.gt.f32.partialorder %v374, 0.0
  %v377 = vmul.f32 %v373, 0.2
  %v378 = vmul.f32 %v374, 0.2
  %v379 = vsel %vm375, %v373, %v377
  %v380 = vsel %vm376, %v374, %v378
  %v381 = vsel %vm80, 16843009, 0
  %v382 = vsel %vm81, 16843009, 0
  %v383 = vunpack.c.0.s8 %v381
  %v384 = vunpack.c.0.s8 %v382
  %vm385 = vcmp.ne.s32.totalorder %v383, 0
  %vm386 = vcmp.ne.s32.totalorder %v384, 0
  %v387 = vsel %vm385, %v379, -1e+30
  %v388 = vsel %vm386, %v380, -1e+30
  %v389 = vsel %vm146, %v387, -inf
  %390 = vmax.xlane.f32.xlu0 %v389
  %v391 = vpop.xlane.xlu0 %390
  %v392 = vsel %vm146, %v388, -inf
  %393 = vmax.xlane.f32.xlu0 %v392
  %v394 = vpop.xlane.xlu0 %393
  %v395 = vmax.f32 %v391, -1e+20
  %v396 = vmax.f32 %v394, -1e+20
  %v397 = vsub.f32 %v387, %v395
  %v398 = vsub.f32 %v388, %v396
  %v399 = vmul.f32 %v397, 1.442695
  %v400 = vpow.pop %v399
  %v401 = vmul.f32 %v398, 1.442695
  %v402 = vpow.pop %v401
  %v403 = vsel %vm146, %v400, 0.0
  %404 = vadd.xlane.f32.xlu0 %v403
  %v405 = vpop.xlane.xlu0 %404
  %v406 = vsel %vm146, %v402, 0.0
  %407 = vadd.xlane.f32.xlu0 %v406
  %v408 = vpop.xlane.xlu0 %407
  %v409 = vmax.f32 %v405, 1e-12
  %v410 = vmax.f32 %v408, 1e-12
  %v411 = vrcp.pop %v409
  %v412 = vmul.f32 %v400, %v411
  %v413 = vrcp.pop %v410
  %v414 = vmul.f32 %v402, %v413
  %vm415 = vcmp.ge.s32.totalorder %v144, 0
  %vm416 = vcmp.lt.s32.totalorder %v144, 8
  %vm417 = vmand %vm415, %vm416
  %v418 = vsel %vm417, 1, 0
  %v419 = vcvt.s32.f32 %v418
  %v420 = vmul.f32 %v137, %v419
  %v421 = vmul.f32 %v140, %v419
  %v422 = vpack.c.bf16 %v421, %v420
  %v423 = vpack.c.bf16 %v360, %v358
  %v424 = vpack.c.bf16 %v414, %v412
  %425 = vset.pattern.permute.xlu0 1
  %426 = vperm.xlu0 %425, %v297
  %v427 = vpop.permute.xlu0 %426
  %429 = vset.pattern.permute.xlu0 1
  %430 = vperm.xlu0 %429, %v302
  %v431 = vpop.permute.xlu0 %430
  %v433 = vlaneseq
  %v434 = vshrl.u32 %v433, 7
  %v435 = vsub.s32 1, %v434
  %v436 = vrot.slane %v223, %v435
  %v437 = vadd.f32 %v427, %v436
  %v438 = vadd.f32 %v431, %v436
  %vm439 = vcmp.gt.f32.partialorder %v437, 0.0
  %vm440 = vcmp.gt.f32.partialorder %v438, 0.0
  %v441 = vmul.f32 %v437, 0.2
  %v442 = vmul.f32 %v438, 0.2
  %v443 = vsel %vm439, %v437, %v441
  %v444 = vsel %vm440, %v438, %v442
  %v445 = vsel %vm331, %v443, -1e+30
  %v446 = vsel %vm332, %v444, -1e+30
  %v447 = vsel %vm146, %v445, -inf
  %448 = vmax.xlane.f32.xlu0 %v447
  %v449 = vpop.xlane.xlu0 %448
  %v450 = vsel %vm146, %v446, -inf
  %451 = vmax.xlane.f32.xlu0 %v450
  %v452 = vpop.xlane.xlu0 %451
  %v453 = vmax.f32 %v449, -1e+20
  %v454 = vmax.f32 %v452, -1e+20
  %v455 = vsub.f32 %v445, %v453
  %v456 = vsub.f32 %v446, %v454
  %v457 = vmul.f32 %v455, 1.442695
  %v458 = vpow.pop %v457
  %v459 = vmul.f32 %v456, 1.442695
  %v460 = vpow.pop %v459
  %v461 = vsel %vm146, %v458, 0.0
  %462 = vadd.xlane.f32.xlu0 %v461
  %v463 = vpop.xlane.xlu0 %462
  %v464 = vsel %vm146, %v460, 0.0
  %465 = vadd.xlane.f32.xlu0 %v464
  %v466 = vpop.xlane.xlu0 %465
  %v467 = vmax.f32 %v463, 1e-12
  %v468 = vmax.f32 %v466, 1e-12
  %v469 = vrcp.pop %v467
  %v470 = vmul.f32 %v458, %v469
  %v471 = vrcp.pop %v468
  %v472 = vmul.f32 %v460, %v471
  %473 = vset.pattern.permute.xlu0 3
  %474 = vperm.xlu0 %473, %v297
  %v475 = vpop.permute.xlu0 %474
  %477 = vset.pattern.permute.xlu0 3
  %478 = vperm.xlu0 %477, %v302
  %v479 = vpop.permute.xlu0 %478
  %v481 = vlaneseq
  %v482 = vshrl.u32 %v481, 7
  %v483 = vsub.s32 3, %v482
  %v484 = vrot.slane %v223, %v483
  %v485 = vadd.f32 %v475, %v484
  %v486 = vadd.f32 %v479, %v484
  %vm487 = vcmp.gt.f32.partialorder %v485, 0.0
  %vm488 = vcmp.gt.f32.partialorder %v486, 0.0
  %v489 = vmul.f32 %v485, 0.2
  %v490 = vmul.f32 %v486, 0.2
  %v491 = vsel %vm487, %v485, %v489
  %v492 = vsel %vm488, %v486, %v490
  %v493 = vsel %vm385, %v491, -1e+30
  %v494 = vsel %vm386, %v492, -1e+30
  %v495 = vsel %vm146, %v493, -inf
  %496 = vmax.xlane.f32.xlu0 %v495
  %v497 = vpop.xlane.xlu0 %496
  %v498 = vsel %vm146, %v494, -inf
  %499 = vmax.xlane.f32.xlu0 %v498
  %v500 = vpop.xlane.xlu0 %499
  %v501 = vmax.f32 %v497, -1e+20
  %v502 = vmax.f32 %v500, -1e+20
  %v503 = vsub.f32 %v493, %v501
  %v504 = vsub.f32 %v494, %v502
  %v505 = vmul.f32 %v503, 1.442695
  %v506 = vpow.pop %v505
  %v507 = vmul.f32 %v504, 1.442695
  %v508 = vpow.pop %v507
  %v509 = vsel %vm146, %v506, 0.0
  %510 = vadd.xlane.f32.xlu0 %v509
  %v511 = vpop.xlane.xlu0 %510
  %v512 = vsel %vm146, %v508, 0.0
  %513 = vadd.xlane.f32.xlu0 %v512
  %v514 = vpop.xlane.xlu0 %513
  %v515 = vmax.f32 %v511, 1e-12
  %v516 = vmax.f32 %v514, 1e-12
  %v517 = vrcp.pop %v515
  %v518 = vmul.f32 %v506, %v517
  %v519 = vrcp.pop %v516
  %v520 = vmul.f32 %v508, %v519
  %vm521 = vcmp.ge.s32.totalorder %v144, 8
  %vm522 = vcmp.lt.s32.totalorder %v144, 16
  %vm523 = vmand %vm521, %vm522
  %v524 = vsel %vm523, 1, 0
  %v525 = vcvt.s32.f32 %v524
  %v526 = vmul.f32 %v137, %v525
  %v527 = vmul.f32 %v140, %v525
  %v528 = vpack.c.bf16 %v527, %v526
  %v529 = vpack.c.bf16 %v472, %v470
  %v530 = vpack.c.bf16 %v520, %v518
  %v532 = vsel %vm146, %v529, 0
  %v535 = vsel %vm146, %v530, 0
  %537 = vmatprep.subr.bf16.mxu0 0
  %538 = vmatpush1.bf16.msra.mxu0 0
  %539 = vmatprep.subr.bf16.mxu0 0
  %540 = vmatpush1.bf16.msra.mxu0 0
  %541 = vmatprep.subr.bf16.mxu0 0
  %542 = vmatpush1.bf16.msra.mxu0 0
  %543 = vmatprep.subr.bf16.mxu0 0
  %544 = vmatpush1.bf16.msra.mxu0 0
  %545 = vmatprep.subr.bf16.mxu0 0
  %546 = vmatpush1.bf16.msra.mxu0 0
  %547 = vmatprep.subr.bf16.mxu0 0
  %548 = vmatpush1.bf16.msra.mxu0 0
  %549 = vmatprep.subr.bf16.mxu0 0
  %550 = vmatpush1.bf16.msra.mxu0 0
  %551 = vmatprep.subr.bf16.mxu0 0
  %552 = vmatpush1.bf16.msra.mxu0 %v528
  %553 = vmatprep.subr.bf16.mxu0 0
  %554 = vmatpush2.bf16.msra.mxu0 0
  %555 = vmatprep.subr.bf16.mxu0 0
  %556 = vmatpush2.bf16.msra.mxu0 0
  %557 = vmatprep.subr.bf16.mxu0 0
  %558 = vmatpush2.bf16.msra.mxu0 0
  %559 = vmatprep.subr.bf16.mxu0 0
  %560 = vmatpush2.bf16.msra.mxu0 0
  %561 = vmatprep.subr.bf16.mxu0 0
  %562 = vmatpush2.bf16.msra.mxu0 0
  %563 = vmatprep.subr.bf16.mxu0 0
  %564 = vmatpush2.bf16.msra.mxu0 0
  %565 = vmatprep.subr.bf16.mxu0 0
  %566 = vmatpush2.bf16.msra.mxu0 0
  %567 = vmatprep.subr.bf16.mxu0 0
  %568 = vmatpush2.bf16.msra.mxu0 0
  %569 = vmatprep.mubr.bf16.mxu0 0
  %570 = vmatmul.mubr.bf16.gmra.mxu0 %v532
  %v571 = vpop.f32.mrf.mxu0
  %v572 = vadd.f32 0.0, %v571
  %v573 = vpop.f32.mrf.mxu0
  %v574 = vpop.f32.mrf.mxu0
  %v575 = vadd.f32 0.0, %v574
  %v576 = vpop.f32.mrf.mxu0
  %577 = vmatprep.mubr.bf16.mxu0 0
  %578 = vmatmul.mubr.bf16.gmra.mxu0 %v535
  %v579 = vpop.f32.mrf.mxu0
  %v580 = vadd.f32 0.0, %v579
  %v581 = vpop.f32.mrf.mxu0
  %v582 = vpop.f32.mrf.mxu0
  %v583 = vadd.f32 0.0, %v582
  %v584 = vpop.f32.mrf.mxu0
  %585 = vdwg.mxu0
  %v587 = vsel %vm146, %v423, 0
  %v590 = vsel %vm146, %v424, 0
  %592 = vmatprep.subr.bf16.mxu0 0
  %593 = vmatpush1.bf16.msra.mxu0 0
  %594 = vmatprep.subr.bf16.mxu0 0
  %595 = vmatpush1.bf16.msra.mxu0 0
  %596 = vmatprep.subr.bf16.mxu0 0
  %597 = vmatpush1.bf16.msra.mxu0 0
  %598 = vmatprep.subr.bf16.mxu0 0
  %599 = vmatpush1.bf16.msra.mxu0 0
  %600 = vmatprep.subr.bf16.mxu0 0
  %601 = vmatpush1.bf16.msra.mxu0 0
  %602 = vmatprep.subr.bf16.mxu0 0
  %603 = vmatpush1.bf16.msra.mxu0 0
  %604 = vmatprep.subr.bf16.mxu0 0
  %605 = vmatpush1.bf16.msra.mxu0 0
  %606 = vmatprep.subr.bf16.mxu0 0
  %607 = vmatpush1.bf16.msra.mxu0 %v422
  %608 = vmatprep.subr.bf16.mxu0 0
  %609 = vmatpush2.bf16.msra.mxu0 0
  %610 = vmatprep.subr.bf16.mxu0 0
  %611 = vmatpush2.bf16.msra.mxu0 0
  %612 = vmatprep.subr.bf16.mxu0 0
  %613 = vmatpush2.bf16.msra.mxu0 0
  %614 = vmatprep.subr.bf16.mxu0 0
  %615 = vmatpush2.bf16.msra.mxu0 0
  %616 = vmatprep.subr.bf16.mxu0 0
  %617 = vmatpush2.bf16.msra.mxu0 0
  %618 = vmatprep.subr.bf16.mxu0 0
  %619 = vmatpush2.bf16.msra.mxu0 0
  %620 = vmatprep.subr.bf16.mxu0 0
  %621 = vmatpush2.bf16.msra.mxu0 0
  %622 = vmatprep.subr.bf16.mxu0 0
  %623 = vmatpush2.bf16.msra.mxu0 0
  %624 = vmatprep.mubr.bf16.mxu0 0
  %625 = vmatmul.mubr.bf16.gmra.mxu0 %v587
  %v626 = vpop.f32.mrf.mxu0
  %v627 = vadd.f32 %v572, %v626
  %v628 = vpop.f32.mrf.mxu0
  %v629 = vpop.f32.mrf.mxu0
  %v630 = vadd.f32 %v575, %v629
  %v631 = vpop.f32.mrf.mxu0
  %632 = vmatprep.mubr.bf16.mxu0 0
  %633 = vmatmul.mubr.bf16.gmra.mxu0 %v590
  %v634 = vpop.f32.mrf.mxu0
  %v635 = vadd.f32 %v580, %v634
  %v636 = vpop.f32.mrf.mxu0
  %v637 = vpop.f32.mrf.mxu0
  %v638 = vadd.f32 %v583, %v637
  %v639 = vpop.f32.mrf.mxu0
  %640 = vdwg.mxu0
  %v641 = vmax.f32 %v627, 0.0
  %v642 = vmax.f32 %v630, 0.0
  %v643 = vmax.f32 %v635, 0.0
  %v644 = vmax.f32 %v638, 0.0
  %v645 = vpack.c.bf16 %v642, %v641
  %v646 = vpack.c.bf16 %v644, %v643
  %v647 = vld [vmem:[%s6] sm:$0xff]
  %v648 = vld [vmem:[%s6 + $0x8] sm:$0xff]
  %v649 = vpack.c.bf16 %v648, %v647
  %v650 = vld [vmem:[%s7] sm:$0x1]
  %v652 = vlaneseq
  %v653 = vshrl.u32 %v652, 7
  %v654 = vsub.s32 0, %v653
  %v655 = vrot.slane %v650, %v654
  %v658 = vsel %vm146, %v645, 0
  %v661 = vsel %vm146, %v646, 0
  %663 = vmatprep.subr.bf16.mxu0 0
  %664 = vmatpush1.bf16.msra.mxu0 0
  %665 = vmatprep.subr.bf16.mxu0 0
  %666 = vmatpush1.bf16.msra.mxu0 0
  %667 = vmatprep.subr.bf16.mxu0 0
  %668 = vmatpush1.bf16.msra.mxu0 0
  %669 = vmatprep.subr.bf16.mxu0 0
  %670 = vmatpush1.bf16.msra.mxu0 0
  %671 = vmatprep.subr.bf16.mxu0 0
  %672 = vmatpush1.bf16.msra.mxu0 0
  %673 = vmatprep.subr.bf16.mxu0 0
  %674 = vmatpush1.bf16.msra.mxu0 0
  %675 = vmatprep.subr.bf16.mxu0 0
  %676 = vmatpush1.bf16.msra.mxu0 0
  %677 = vmatprep.subr.bf16.mxu0 0
  %678 = vmatpush1.bf16.msra.mxu0 %v649
  %679 = vmatprep.subr.bf16.mxu0 0
  %680 = vmatpush2.bf16.msra.mxu0 0
  %681 = vmatprep.subr.bf16.mxu0 0
  %682 = vmatpush2.bf16.msra.mxu0 0
  %683 = vmatprep.subr.bf16.mxu0 0
  %684 = vmatpush2.bf16.msra.mxu0 0
  %685 = vmatprep.subr.bf16.mxu0 0
  %686 = vmatpush2.bf16.msra.mxu0 0
  %687 = vmatprep.subr.bf16.mxu0 0
  %688 = vmatpush2.bf16.msra.mxu0 0
  %689 = vmatprep.subr.bf16.mxu0 0
  %690 = vmatpush2.bf16.msra.mxu0 0
  %691 = vmatprep.subr.bf16.mxu0 0
  %692 = vmatpush2.bf16.msra.mxu0 0
  %693 = vmatprep.subr.bf16.mxu0 0
  %694 = vmatpush2.bf16.msra.mxu0 0
  %695 = vmatprep.mubr.bf16.mxu0 0
  %696 = vmatmul.mubr.bf16.gmra.mxu0 %v658
  %v697 = vpop.f32.mrf.mxu0
  %v698 = vadd.f32 %v655, %v697
  %v699 = vpop.f32.mrf.mxu0
  %v700 = vpop.f32.mrf.mxu0
  %v701 = vadd.f32 %v655, %v700
  %v702 = vpop.f32.mrf.mxu0
  %703 = vmatprep.mubr.bf16.mxu0 0
  %704 = vmatmul.mubr.bf16.gmra.mxu0 %v661
  %v705 = vpop.f32.mrf.mxu0
  %v706 = vadd.f32 %v655, %v705
  %v707 = vpop.f32.mrf.mxu0
  %v708 = vpop.f32.mrf.mxu0
  %v709 = vadd.f32 %v655, %v708
  %v710 = vpop.f32.mrf.mxu0
  %711 = vdwg.mxu0
  %v712 = vtanh.pop %v698
  %v713 = vtanh.pop %v701
  %v714 = vtanh.pop %v706
  %v715 = vtanh.pop %v709
  %v716 = vld [vmem:[%s8] sm:$0x1]
  %v717 = vsel %vm146, %v712, 0.0
  %v718 = vsel %vm146, %v713, 0.0
  %v719 = vadd.f32 %v717, %v718
  %v720 = vrot.slane %v719, 4
  %v721 = vadd.f32 %v719, %v720
  %v722 = vrot.slane %v721, 2
  %v723 = vadd.f32 %v721, %v722
  %v724 = vrot.slane %v723, 1
  %v725 = vadd.f32 %v723, %v724
  %v726 = vrcp.pop 16.0
  %v727 = vmul.f32 %v725, %v726
  %v728 = vmul.f32 %v716, %v727
  %vm729 = vcmask 122880
  %v730 = vsel %vm729, %v728, 0.0
  %731 = vadd.xlane.f32.xlu0 %v730
  %v732 = vpop.xlane.xlu0 %731
  %v733 = vsel %vm146, %v714, 0.0
  %v734 = vsel %vm146, %v715, 0.0
  %v735 = vadd.f32 %v733, %v734
  %v736 = vrot.slane %v735, 4
  %v737 = vadd.f32 %v735, %v736
  %v738 = vrot.slane %v737, 2
  %v739 = vadd.f32 %v737, %v738
  %v740 = vrot.slane %v739, 1
  %v741 = vadd.f32 %v739, %v740
  %v742 = vmul.f32 %v741, %v726
  %v743 = vmul.f32 %v716, %v742
  %v744 = vsel %vm729, %v743, 0.0
  %745 = vadd.xlane.f32.xlu0 %v744
  %v746 = vpop.xlane.xlu0 %745
  %v747 = vmax.f32 %v732, %v746
  %v748 = vsub.f32 %v732, %v747
  %v749 = vmul.f32 %v748, 1.442695
  %v750 = vpow.pop %v749
  %v751 = vsub.f32 %v746, %v747
  %v752 = vmul.f32 %v751, 1.442695
  %v753 = vpow.pop %v752
  %v754 = vadd.f32 %v750, %v753
  %v755 = vrcp.pop %v754
  %v756 = vmul.f32 1.0, %v755
  %v757 = vmul.f32 %v750, %v756
  %v758 = vlaneseq
  %v759 = vshrl.u32 %v758, 7
  %v760 = vsub.s32 0, %v759
  %v761 = vrot.slane %v757, %v760
  %v762 = vmul.f32 %v761, %v641
  %v763 = vmul.f32 %v761, %v642
  %v764 = vmul.f32 %v753, %v756
  %v765 = vlaneseq
  %v766 = vshrl.u32 %v765, 7
  %v767 = vsub.s32 0, %v766
  %v768 = vrot.slane %v764, %v767
  %v769 = vmul.f32 %v768, %v643
  %v770 = vmul.f32 %v768, %v644
  %v771 = vadd.f32 %v762, %v769
  %v772 = vadd.f32 %v763, %v770
  %v773 = vpack.c.bf16 %v772, %v771
  %v774 = vld [vmem:[%s9] sm:$0xff]
  %v775 = vld [vmem:[%s9 + $0x8] sm:$0xff]
  %v776 = vpack.c.bf16 %v775, %v774
  %v777 = vld [vmem:[%s10] sm:$0x1]
  %v779 = vlaneseq
  %v780 = vshrl.u32 %v779, 7
  %v781 = vsub.s32 0, %v780
  %v782 = vrot.slane %v777, %v781
  %v785 = vsel %vm146, %v773, 0
  %787 = vmatprep.subr.bf16.mxu0 0
  %788 = vmatpush1.bf16.msra.mxu0 0
  %789 = vmatprep.subr.bf16.mxu0 0
  %790 = vmatpush1.bf16.msra.mxu0 0
  %791 = vmatprep.subr.bf16.mxu0 0
  %792 = vmatpush1.bf16.msra.mxu0 0
  %793 = vmatprep.subr.bf16.mxu0 0
  %794 = vmatpush1.bf16.msra.mxu0 0
  %795 = vmatprep.subr.bf16.mxu0 0
  %796 = vmatpush1.bf16.msra.mxu0 0
  %797 = vmatprep.subr.bf16.mxu0 0
  %798 = vmatpush1.bf16.msra.mxu0 0
  %799 = vmatprep.subr.bf16.mxu0 0
  %800 = vmatpush1.bf16.msra.mxu0 0
  %801 = vmatprep.subr.bf16.mxu0 0
  %802 = vmatpush1.bf16.msra.mxu0 %v776
  %803 = vmatprep.subr.bf16.mxu0 0
  %804 = vmatpush2.bf16.msra.mxu0 0
  %805 = vmatprep.subr.bf16.mxu0 0
  %806 = vmatpush2.bf16.msra.mxu0 0
  %807 = vmatprep.subr.bf16.mxu0 0
  %808 = vmatpush2.bf16.msra.mxu0 0
  %809 = vmatprep.subr.bf16.mxu0 0
  %810 = vmatpush2.bf16.msra.mxu0 0
  %811 = vmatprep.subr.bf16.mxu0 0
  %812 = vmatpush2.bf16.msra.mxu0 0
  %813 = vmatprep.subr.bf16.mxu0 0
  %814 = vmatpush2.bf16.msra.mxu0 0
  %815 = vmatprep.subr.bf16.mxu0 0
  %816 = vmatpush2.bf16.msra.mxu0 0
  %817 = vmatprep.subr.bf16.mxu0 0
  %818 = vmatpush2.bf16.msra.mxu0 0
  %819 = vmatprep.mubr.bf16.mxu0 0
  %820 = vmatmul.mubr.bf16.gmra.mxu0 %v785
  %v821 = vpop.f32.mrf.mxu0
  %v822 = vadd.f32 %v782, %v821
  %v823 = vpop.f32.mrf.mxu0
  %v824 = vpop.f32.mrf.mxu0
  %v825 = vadd.f32 %v782, %v824
  %v826 = vpop.f32.mrf.mxu0
  %827 = vdwg.mxu0
  %v828 = vld [vmem:[%s11] sm:$0xf]
  %v830 = vsel %vm146, %v828, 0
  %v833 = vsel %vm146, %v822, 0
  %v836 = vsel %vm146, %v825, 0
  %838 = vmatprep.subr.mxu0 0.0
  %839 = vmatpush1.xpose.msra.mxu0 0.0
  %840 = vmatprep.subr.mxu0 0.0
  %841 = vmatpush1.xpose.msra.mxu0 0.0
  %842 = vmatprep.subr.mxu0 0.0
  %843 = vmatpush1.xpose.msra.mxu0 0.0
  %844 = vmatprep.subr.mxu0 0.0
  %845 = vmatpush1.xpose.msra.mxu0 0.0
  %846 = vmatprep.subr.mxu0 0.0
  %847 = vmatpush1.xpose.msra.mxu0 0.0
  %848 = vmatprep.subr.mxu0 0.0
  %849 = vmatpush1.xpose.msra.mxu0 0.0
  %850 = vmatprep.subr.mxu0 0.0
  %851 = vmatpush1.xpose.msra.mxu0 0.0
  %852 = vmatprep.subr.mxu0 0.0
  %853 = vmatpush1.xpose.msra.mxu0 0.0
  %854 = vmatprep.subr.mxu0 0.0
  %855 = vmatpush1.xpose.msra.mxu0 0.0
  %856 = vmatprep.subr.mxu0 0.0
  %857 = vmatpush1.xpose.msra.mxu0 0.0
  %858 = vmatprep.subr.mxu0 0.0
  %859 = vmatpush1.xpose.msra.mxu0 0.0
  %860 = vmatprep.subr.mxu0 0.0
  %861 = vmatpush1.xpose.msra.mxu0 0.0
  %862 = vmatprep.subr.mxu0 0.0
  %863 = vmatpush1.xpose.msra.mxu0 0.0
  %864 = vmatprep.subr.mxu0 0.0
  %865 = vmatpush1.xpose.msra.mxu0 0.0
  %866 = vmatprep.subr.mxu0 0.0
  %867 = vmatpush1.xpose.msra.mxu0 %v836
  %868 = vmatprep.subr.mxu0 0.0
  %869 = vmatpush1.xpose.msra.mxu0 %v833
  %870 = vmatprep.subr.mxu0 0.0
  %871 = vmatpush2.xpose.msra.mxu0 0.0
  %872 = vmatprep.subr.mxu0 0.0
  %873 = vmatpush2.xpose.msra.mxu0 0.0
  %874 = vmatprep.subr.mxu0 0.0
  %875 = vmatpush2.xpose.msra.mxu0 0.0
  %876 = vmatprep.subr.mxu0 0.0
  %877 = vmatpush2.xpose.msra.mxu0 0.0
  %878 = vmatprep.subr.mxu0 0.0
  %879 = vmatpush2.xpose.msra.mxu0 0.0
  %880 = vmatprep.subr.mxu0 0.0
  %881 = vmatpush2.xpose.msra.mxu0 0.0
  %882 = vmatprep.subr.mxu0 0.0
  %883 = vmatpush2.xpose.msra.mxu0 0.0
  %884 = vmatprep.subr.mxu0 0.0
  %885 = vmatpush2.xpose.msra.mxu0 0.0
  %886 = vmatprep.subr.mxu0 0.0
  %887 = vmatpush2.xpose.msra.mxu0 0.0
  %888 = vmatprep.subr.mxu0 0.0
  %889 = vmatpush2.xpose.msra.mxu0 0.0
  %890 = vmatprep.subr.mxu0 0.0
  %891 = vmatpush2.xpose.msra.mxu0 0.0
  %892 = vmatprep.subr.mxu0 0.0
  %893 = vmatpush2.xpose.msra.mxu0 0.0
  %894 = vmatprep.subr.mxu0 0.0
  %895 = vmatpush2.xpose.msra.mxu0 0.0
  %896 = vmatprep.subr.mxu0 0.0
  %897 = vmatpush2.xpose.msra.mxu0 0.0
  %898 = vmatprep.subr.mxu0 0.0
  %899 = vmatpush2.xpose.msra.mxu0 0.0
  %900 = vmatprep.subr.mxu0 0.0
  %901 = vmatpush2.xpose.msra.mxu0 0.0
  %902 = vmatprep.mubr.f32.mxu0 0.0
  %903 = vmatmul.mubr.f32.gmra.mxu0 %v830
  %v904 = vpop.f32.mrf.mxu0
  %v905 = vadd.f32 0.0, %v904
  %v906 = vpop.f32.mrf.mxu0
  %907 = vdwg.mxu0
  %v908 = vld [vmem:[%s12] sm:$0xf]
  %v910 = vsel %vm146, %v908, 0
  %912 = vmatprep.subr.mxu0 0.0
  %913 = vmatpush1.xpose.msra.mxu0 0.0
  %914 = vmatprep.subr.mxu0 0.0
  %915 = vmatpush1.xpose.msra.mxu0 0.0
  %916 = vmatprep.subr.mxu0 0.0
  %917 = vmatpush1.xpose.msra.mxu0 0.0
  %918 = vmatprep.subr.mxu0 0.0
  %919 = vmatpush1.xpose.msra.mxu0 0.0
  %920 = vmatprep.subr.mxu0 0.0
  %921 = vmatpush1.xpose.msra.mxu0 0.0
  %922 = vmatprep.subr.mxu0 0.0
  %923 = vmatpush1.xpose.msra.mxu0 0.0
  %924 = vmatprep.subr.mxu0 0.0
  %925 = vmatpush1.xpose.msra.mxu0 0.0
  %926 = vmatprep.subr.mxu0 0.0
  %927 = vmatpush1.xpose.msra.mxu0 0.0
  %928 = vmatprep.subr.mxu0 0.0
  %929 = vmatpush1.xpose.msra.mxu0 0.0
  %930 = vmatprep.subr.mxu0 0.0
  %931 = vmatpush1.xpose.msra.mxu0 0.0
  %932 = vmatprep.subr.mxu0 0.0
  %933 = vmatpush1.xpose.msra.mxu0 0.0
  %934 = vmatprep.subr.mxu0 0.0
  %935 = vmatpush1.xpose.msra.mxu0 0.0
  %936 = vmatprep.subr.mxu0 0.0
  %937 = vmatpush1.xpose.msra.mxu0 0.0
  %938 = vmatprep.subr.mxu0 0.0
  %939 = vmatpush1.xpose.msra.mxu0 0.0
  %940 = vmatprep.subr.mxu0 0.0
  %941 = vmatpush1.xpose.msra.mxu0 0.0
  %942 = vmatprep.subr.mxu0 0.0
  %943 = vmatpush1.xpose.msra.mxu0 %v910
  %944 = vmatprep.subr.mxu0 0.0
  %945 = vmatpush2.xpose.msra.mxu0 0.0
  %946 = vmatprep.subr.mxu0 0.0
  %947 = vmatpush2.xpose.msra.mxu0 0.0
  %948 = vmatprep.subr.mxu0 0.0
  %949 = vmatpush2.xpose.msra.mxu0 0.0
  %950 = vmatprep.subr.mxu0 0.0
  %951 = vmatpush2.xpose.msra.mxu0 0.0
  %952 = vmatprep.subr.mxu0 0.0
  %953 = vmatpush2.xpose.msra.mxu0 0.0
  %954 = vmatprep.subr.mxu0 0.0
  %955 = vmatpush2.xpose.msra.mxu0 0.0
  %956 = vmatprep.subr.mxu0 0.0
  %957 = vmatpush2.xpose.msra.mxu0 0.0
  %958 = vmatprep.subr.mxu0 0.0
  %959 = vmatpush2.xpose.msra.mxu0 0.0
  %960 = vmatprep.subr.mxu0 0.0
  %961 = vmatpush2.xpose.msra.mxu0 0.0
  %962 = vmatprep.subr.mxu0 0.0
  %963 = vmatpush2.xpose.msra.mxu0 0.0
  %964 = vmatprep.subr.mxu0 0.0
  %965 = vmatpush2.xpose.msra.mxu0 0.0
  %966 = vmatprep.subr.mxu0 0.0
  %967 = vmatpush2.xpose.msra.mxu0 0.0
  %968 = vmatprep.subr.mxu0 0.0
  %969 = vmatpush2.xpose.msra.mxu0 0.0
  %970 = vmatprep.subr.mxu0 0.0
  %971 = vmatpush2.xpose.msra.mxu0 0.0
  %972 = vmatprep.subr.mxu0 0.0
  %973 = vmatpush2.xpose.msra.mxu0 0.0
  %974 = vmatprep.subr.mxu0 0.0
  %975 = vmatpush2.xpose.msra.mxu0 0.0
  %976 = vmatprep.mubr.f32.mxu0 0.0
  %977 = vmatmul.mubr.f32.gmra.mxu0 %v833
  %v978 = vpop.f32.mrf.mxu0
  %v979 = vadd.f32 0.0, %v978
  %v980 = vpop.f32.mrf.mxu0
  %981 = vmatprep.mubr.f32.mxu0 0.0
  %982 = vmatmul.mubr.f32.gmra.mxu0 %v836
  %v983 = vpop.f32.mrf.mxu0
  %v984 = vadd.f32 0.0, %v983
  %v985 = vpop.f32.mrf.mxu0
  %986 = vdwg.mxu0
  %988 = vset.pattern.permute.xlu0 0
  %989 = vperm.xlu0 %988, %v979
  %v990 = vpop.permute.xlu0 %989
  %993 = vset.pattern.permute.xlu0 0
  %994 = vperm.xlu0 %993, %v984
  %v995 = vpop.permute.xlu0 %994
  %v997 = vlaneseq
  %v998 = vshrl.u32 %v997, 7
  %v999 = vsub.s32 0, %v998
  %v1000 = vrot.slane %v905, %v999
  %v1001 = vadd.f32 %v990, %v1000
  %v1002 = vadd.f32 %v995, %v1000
  %vm1003 = vcmp.gt.f32.partialorder %v1001, 0.0
  %vm1004 = vcmp.gt.f32.partialorder %v1002, 0.0
  %v1005 = vmul.f32 %v1001, 0.2
  %v1006 = vmul.f32 %v1002, 0.2
  %v1007 = vsel %vm1003, %v1001, %v1005
  %v1008 = vsel %vm1004, %v1002, %v1006
  %v1009 = vsel %vm331, %v1007, -1e+30
  %v1010 = vsel %vm332, %v1008, -1e+30
  %v1011 = vsel %vm146, %v1009, -inf
  %1012 = vmax.xlane.f32.xlu0 %v1011
  %v1013 = vpop.xlane.xlu0 %1012
  %v1014 = vsel %vm146, %v1010, -inf
  %1015 = vmax.xlane.f32.xlu0 %v1014
  %v1016 = vpop.xlane.xlu0 %1015
  %v1017 = vmax.f32 %v1013, -1e+20
  %v1018 = vmax.f32 %v1016, -1e+20
  %v1019 = vsub.f32 %v1009, %v1017
  %v1020 = vsub.f32 %v1010, %v1018
  %v1021 = vmul.f32 %v1019, 1.442695
  %v1022 = vpow.pop %v1021
  %v1023 = vmul.f32 %v1020, 1.442695
  %v1024 = vpow.pop %v1023
  %v1025 = vsel %vm146, %v1022, 0.0
  %1026 = vadd.xlane.f32.xlu0 %v1025
  %v1027 = vpop.xlane.xlu0 %1026
  %v1028 = vsel %vm146, %v1024, 0.0
  %1029 = vadd.xlane.f32.xlu0 %v1028
  %v1030 = vpop.xlane.xlu0 %1029
  %v1031 = vmax.f32 %v1027, 1e-12
  %v1032 = vmax.f32 %v1030, 1e-12
  %v1033 = vrcp.pop %v1031
  %v1034 = vmul.f32 %v1022, %v1033
  %v1035 = vrcp.pop %v1032
  %v1036 = vmul.f32 %v1024, %v1035
  %1037 = vset.pattern.permute.xlu0 2
  %1038 = vperm.xlu0 %1037, %v979
  %v1039 = vpop.permute.xlu0 %1038
  %1041 = vset.pattern.permute.xlu0 2
  %1042 = vperm.xlu0 %1041, %v984
  %v1043 = vpop.permute.xlu0 %1042
  %v1045 = vlaneseq
  %v1046 = vshrl.u32 %v1045, 7
  %v1047 = vsub.s32 2, %v1046
  %v1048 = vrot.slane %v905, %v1047
  %v1049 = vadd.f32 %v1039, %v1048
  %v1050 = vadd.f32 %v1043, %v1048
  %vm1051 = vcmp.gt.f32.partialorder %v1049, 0.0
  %vm1052 = vcmp.gt.f32.partialorder %v1050, 0.0
  %v1053 = vmul.f32 %v1049, 0.2
  %v1054 = vmul.f32 %v1050, 0.2
  %v1055 = vsel %vm1051, %v1049, %v1053
  %v1056 = vsel %vm1052, %v1050, %v1054
  %v1057 = vsel %vm385, %v1055, -1e+30
  %v1058 = vsel %vm386, %v1056, -1e+30
  %v1059 = vsel %vm146, %v1057, -inf
  %1060 = vmax.xlane.f32.xlu0 %v1059
  %v1061 = vpop.xlane.xlu0 %1060
  %v1062 = vsel %vm146, %v1058, -inf
  %1063 = vmax.xlane.f32.xlu0 %v1062
  %v1064 = vpop.xlane.xlu0 %1063
  %v1065 = vmax.f32 %v1061, -1e+20
  %v1066 = vmax.f32 %v1064, -1e+20
  %v1067 = vsub.f32 %v1057, %v1065
  %v1068 = vsub.f32 %v1058, %v1066
  %v1069 = vmul.f32 %v1067, 1.442695
  %v1070 = vpow.pop %v1069
  %v1071 = vmul.f32 %v1068, 1.442695
  %v1072 = vpow.pop %v1071
  %v1073 = vsel %vm146, %v1070, 0.0
  %1074 = vadd.xlane.f32.xlu0 %v1073
  %v1075 = vpop.xlane.xlu0 %1074
  %v1076 = vsel %vm146, %v1072, 0.0
  %1077 = vadd.xlane.f32.xlu0 %v1076
  %v1078 = vpop.xlane.xlu0 %1077
  %v1079 = vmax.f32 %v1075, 1e-12
  %v1080 = vmax.f32 %v1078, 1e-12
  %v1081 = vrcp.pop %v1079
  %v1082 = vmul.f32 %v1070, %v1081
  %v1083 = vrcp.pop %v1080
  %v1084 = vmul.f32 %v1072, %v1083
  %v1085 = vmul.f32 %v822, %v419
  %v1086 = vmul.f32 %v825, %v419
  %v1087 = vpack.c.bf16 %v1086, %v1085
  %v1088 = vpack.c.bf16 %v1036, %v1034
  %v1089 = vpack.c.bf16 %v1084, %v1082
  %1090 = vset.pattern.permute.xlu0 1
  %1091 = vperm.xlu0 %1090, %v979
  %v1092 = vpop.permute.xlu0 %1091
  %1094 = vset.pattern.permute.xlu0 1
  %1095 = vperm.xlu0 %1094, %v984
  %v1096 = vpop.permute.xlu0 %1095
  %v1098 = vlaneseq
  %v1099 = vshrl.u32 %v1098, 7
  %v1100 = vsub.s32 1, %v1099
  %v1101 = vrot.slane %v905, %v1100
  %v1102 = vadd.f32 %v1092, %v1101
  %v1103 = vadd.f32 %v1096, %v1101
  %vm1104 = vcmp.gt.f32.partialorder %v1102, 0.0
  %vm1105 = vcmp.gt.f32.partialorder %v1103, 0.0
  %v1106 = vmul.f32 %v1102, 0.2
  %v1107 = vmul.f32 %v1103, 0.2
  %v1108 = vsel %vm1104, %v1102, %v1106
  %v1109 = vsel %vm1105, %v1103, %v1107
  %v1110 = vsel %vm331, %v1108, -1e+30
  %v1111 = vsel %vm332, %v1109, -1e+30
  %v1112 = vsel %vm146, %v1110, -inf
  %1113 = vmax.xlane.f32.xlu0 %v1112
  %v1114 = vpop.xlane.xlu0 %1113
  %v1115 = vsel %vm146, %v1111, -inf
  %1116 = vmax.xlane.f32.xlu0 %v1115
  %v1117 = vpop.xlane.xlu0 %1116
  %v1118 = vmax.f32 %v1114, -1e+20
  %v1119 = vmax.f32 %v1117, -1e+20
  %v1120 = vsub.f32 %v1110, %v1118
  %v1121 = vsub.f32 %v1111, %v1119
  %v1122 = vmul.f32 %v1120, 1.442695
  %v1123 = vpow.pop %v1122
  %v1124 = vmul.f32 %v1121, 1.442695
  %v1125 = vpow.pop %v1124
  %v1126 = vsel %vm146, %v1123, 0.0
  %1127 = vadd.xlane.f32.xlu0 %v1126
  %v1128 = vpop.xlane.xlu0 %1127
  %v1129 = vsel %vm146, %v1125, 0.0
  %1130 = vadd.xlane.f32.xlu0 %v1129
  %v1131 = vpop.xlane.xlu0 %1130
  %v1132 = vmax.f32 %v1128, 1e-12
  %v1133 = vmax.f32 %v1131, 1e-12
  %v1134 = vrcp.pop %v1132
  %v1135 = vmul.f32 %v1123, %v1134
  %v1136 = vrcp.pop %v1133
  %v1137 = vmul.f32 %v1125, %v1136
  %1138 = vset.pattern.permute.xlu0 3
  %1139 = vperm.xlu0 %1138, %v979
  %v1140 = vpop.permute.xlu0 %1139
  %1142 = vset.pattern.permute.xlu0 3
  %1143 = vperm.xlu0 %1142, %v984
  %v1144 = vpop.permute.xlu0 %1143
  %v1146 = vlaneseq
  %v1147 = vshrl.u32 %v1146, 7
  %v1148 = vsub.s32 3, %v1147
  %v1149 = vrot.slane %v905, %v1148
  %v1150 = vadd.f32 %v1140, %v1149
  %v1151 = vadd.f32 %v1144, %v1149
  %vm1152 = vcmp.gt.f32.partialorder %v1150, 0.0
  %vm1153 = vcmp.gt.f32.partialorder %v1151, 0.0
  %v1154 = vmul.f32 %v1150, 0.2
  %v1155 = vmul.f32 %v1151, 0.2
  %v1156 = vsel %vm1152, %v1150, %v1154
  %v1157 = vsel %vm1153, %v1151, %v1155
  %v1158 = vsel %vm385, %v1156, -1e+30
  %v1159 = vsel %vm386, %v1157, -1e+30
  %v1160 = vsel %vm146, %v1158, -inf
  %1161 = vmax.xlane.f32.xlu0 %v1160
  %v1162 = vpop.xlane.xlu0 %1161
  %v1163 = vsel %vm146, %v1159, -inf
  %1164 = vmax.xlane.f32.xlu0 %v1163
  %v1165 = vpop.xlane.xlu0 %1164
  %v1166 = vmax.f32 %v1162, -1e+20
  %v1167 = vmax.f32 %v1165, -1e+20
  %v1168 = vsub.f32 %v1158, %v1166
  %v1169 = vsub.f32 %v1159, %v1167
  %v1170 = vmul.f32 %v1168, 1.442695
  %v1171 = vpow.pop %v1170
  %v1172 = vmul.f32 %v1169, 1.442695
  %v1173 = vpow.pop %v1172
  %v1174 = vsel %vm146, %v1171, 0.0
  %1175 = vadd.xlane.f32.xlu0 %v1174
  %v1176 = vpop.xlane.xlu0 %1175
  %v1177 = vsel %vm146, %v1173, 0.0
  %1178 = vadd.xlane.f32.xlu0 %v1177
  %v1179 = vpop.xlane.xlu0 %1178
  %v1180 = vmax.f32 %v1176, 1e-12
  %v1181 = vmax.f32 %v1179, 1e-12
  %v1182 = vrcp.pop %v1180
  %v1183 = vmul.f32 %v1171, %v1182
  %v1184 = vrcp.pop %v1181
  %v1185 = vmul.f32 %v1173, %v1184
  %v1186 = vmul.f32 %v822, %v525
  %v1187 = vmul.f32 %v825, %v525
  %v1188 = vpack.c.bf16 %v1187, %v1186
  %v1189 = vpack.c.bf16 %v1137, %v1135
  %v1190 = vpack.c.bf16 %v1185, %v1183
  %v1192 = vsel %vm146, %v1189, 0
  %v1195 = vsel %vm146, %v1190, 0
  %1197 = vmatprep.subr.bf16.mxu0 0
  %1198 = vmatpush1.bf16.msra.mxu0 0
  %1199 = vmatprep.subr.bf16.mxu0 0
  %1200 = vmatpush1.bf16.msra.mxu0 0
  %1201 = vmatprep.subr.bf16.mxu0 0
  %1202 = vmatpush1.bf16.msra.mxu0 0
  %1203 = vmatprep.subr.bf16.mxu0 0
  %1204 = vmatpush1.bf16.msra.mxu0 0
  %1205 = vmatprep.subr.bf16.mxu0 0
  %1206 = vmatpush1.bf16.msra.mxu0 0
  %1207 = vmatprep.subr.bf16.mxu0 0
  %1208 = vmatpush1.bf16.msra.mxu0 0
  %1209 = vmatprep.subr.bf16.mxu0 0
  %1210 = vmatpush1.bf16.msra.mxu0 0
  %1211 = vmatprep.subr.bf16.mxu0 0
  %1212 = vmatpush1.bf16.msra.mxu0 %v1188
  %1213 = vmatprep.subr.bf16.mxu0 0
  %1214 = vmatpush2.bf16.msra.mxu0 0
  %1215 = vmatprep.subr.bf16.mxu0 0
  %1216 = vmatpush2.bf16.msra.mxu0 0
  %1217 = vmatprep.subr.bf16.mxu0 0
  %1218 = vmatpush2.bf16.msra.mxu0 0
  %1219 = vmatprep.subr.bf16.mxu0 0
  %1220 = vmatpush2.bf16.msra.mxu0 0
  %1221 = vmatprep.subr.bf16.mxu0 0
  %1222 = vmatpush2.bf16.msra.mxu0 0
  %1223 = vmatprep.subr.bf16.mxu0 0
  %1224 = vmatpush2.bf16.msra.mxu0 0
  %1225 = vmatprep.subr.bf16.mxu0 0
  %1226 = vmatpush2.bf16.msra.mxu0 0
  %1227 = vmatprep.subr.bf16.mxu0 0
  %1228 = vmatpush2.bf16.msra.mxu0 0
  %1229 = vmatprep.mubr.bf16.mxu0 0
  %1230 = vmatmul.mubr.bf16.gmra.mxu0 %v1192
  %v1231 = vpop.f32.mrf.mxu0
  %v1232 = vadd.f32 0.0, %v1231
  %v1233 = vpop.f32.mrf.mxu0
  %v1234 = vpop.f32.mrf.mxu0
  %v1235 = vadd.f32 0.0, %v1234
  %v1236 = vpop.f32.mrf.mxu0
  %1237 = vmatprep.mubr.bf16.mxu0 0
  %1238 = vmatmul.mubr.bf16.gmra.mxu0 %v1195
  %v1239 = vpop.f32.mrf.mxu0
  %v1240 = vadd.f32 0.0, %v1239
  %v1241 = vpop.f32.mrf.mxu0
  %v1242 = vpop.f32.mrf.mxu0
  %v1243 = vadd.f32 0.0, %v1242
  %v1244 = vpop.f32.mrf.mxu0
  %1245 = vdwg.mxu0
  %v1247 = vsel %vm146, %v1088, 0
  %v1250 = vsel %vm146, %v1089, 0
  %1252 = vmatprep.subr.bf16.mxu0 0
  %1253 = vmatpush1.bf16.msra.mxu0 0
  %1254 = vmatprep.subr.bf16.mxu0 0
  %1255 = vmatpush1.bf16.msra.mxu0 0
  %1256 = vmatprep.subr.bf16.mxu0 0
  %1257 = vmatpush1.bf16.msra.mxu0 0
  %1258 = vmatprep.subr.bf16.mxu0 0
  %1259 = vmatpush1.bf16.msra.mxu0 0
  %1260 = vmatprep.subr.bf16.mxu0 0
  %1261 = vmatpush1.bf16.msra.mxu0 0
  %1262 = vmatprep.subr.bf16.mxu0 0
  %1263 = vmatpush1.bf16.msra.mxu0 0
  %1264 = vmatprep.subr.bf16.mxu0 0
  %1265 = vmatpush1.bf16.msra.mxu0 0
  %1266 = vmatprep.subr.bf16.mxu0 0
  %1267 = vmatpush1.bf16.msra.mxu0 %v1087
  %1268 = vmatprep.subr.bf16.mxu0 0
  %1269 = vmatpush2.bf16.msra.mxu0 0
  %1270 = vmatprep.subr.bf16.mxu0 0
  %1271 = vmatpush2.bf16.msra.mxu0 0
  %1272 = vmatprep.subr.bf16.mxu0 0
  %1273 = vmatpush2.bf16.msra.mxu0 0
  %1274 = vmatprep.subr.bf16.mxu0 0
  %1275 = vmatpush2.bf16.msra.mxu0 0
  %1276 = vmatprep.subr.bf16.mxu0 0
  %1277 = vmatpush2.bf16.msra.mxu0 0
  %1278 = vmatprep.subr.bf16.mxu0 0
  %1279 = vmatpush2.bf16.msra.mxu0 0
  %1280 = vmatprep.subr.bf16.mxu0 0
  %1281 = vmatpush2.bf16.msra.mxu0 0
  %1282 = vmatprep.subr.bf16.mxu0 0
  %1283 = vmatpush2.bf16.msra.mxu0 0
  %1284 = vmatprep.mubr.bf16.mxu0 0
  %1285 = vmatmul.mubr.bf16.gmra.mxu0 %v1247
  %v1286 = vpop.f32.mrf.mxu0
  %v1287 = vadd.f32 %v1232, %v1286
  %v1288 = vpop.f32.mrf.mxu0
  %v1289 = vpop.f32.mrf.mxu0
  %v1290 = vadd.f32 %v1235, %v1289
  %v1291 = vpop.f32.mrf.mxu0
  %1292 = vmatprep.mubr.bf16.mxu0 0
  %1293 = vmatmul.mubr.bf16.gmra.mxu0 %v1250
  %v1294 = vpop.f32.mrf.mxu0
  %v1295 = vadd.f32 %v1240, %v1294
  %v1296 = vpop.f32.mrf.mxu0
  %v1297 = vpop.f32.mrf.mxu0
  %v1298 = vadd.f32 %v1243, %v1297
  %v1299 = vpop.f32.mrf.mxu0
  %1300 = vdwg.mxu0
  %v1301 = vmax.f32 %v1287, 0.0
  %v1302 = vmax.f32 %v1290, 0.0
  %v1303 = vmax.f32 %v1295, 0.0
  %v1304 = vmax.f32 %v1298, 0.0
  %v1305 = vpack.c.bf16 %v1302, %v1301
  %v1306 = vpack.c.bf16 %v1304, %v1303
  %v1307 = vld [vmem:[%s13] sm:$0xff]
  %v1308 = vld [vmem:[%s13 + $0x8] sm:$0xff]
  %v1309 = vpack.c.bf16 %v1308, %v1307
  %v1310 = vld [vmem:[%s14] sm:$0x1]
  %v1312 = vlaneseq
  %v1313 = vshrl.u32 %v1312, 7
  %v1314 = vsub.s32 0, %v1313
  %v1315 = vrot.slane %v1310, %v1314
  %v1318 = vsel %vm146, %v1305, 0
  %v1321 = vsel %vm146, %v1306, 0
  %1323 = vmatprep.subr.bf16.mxu0 0
  %1324 = vmatpush1.bf16.msra.mxu0 0
  %1325 = vmatprep.subr.bf16.mxu0 0
  %1326 = vmatpush1.bf16.msra.mxu0 0
  %1327 = vmatprep.subr.bf16.mxu0 0
  %1328 = vmatpush1.bf16.msra.mxu0 0
  %1329 = vmatprep.subr.bf16.mxu0 0
  %1330 = vmatpush1.bf16.msra.mxu0 0
  %1331 = vmatprep.subr.bf16.mxu0 0
  %1332 = vmatpush1.bf16.msra.mxu0 0
  %1333 = vmatprep.subr.bf16.mxu0 0
  %1334 = vmatpush1.bf16.msra.mxu0 0
  %1335 = vmatprep.subr.bf16.mxu0 0
  %1336 = vmatpush1.bf16.msra.mxu0 0
  %1337 = vmatprep.subr.bf16.mxu0 0
  %1338 = vmatpush1.bf16.msra.mxu0 %v1309
  %1339 = vmatprep.subr.bf16.mxu0 0
  %1340 = vmatpush2.bf16.msra.mxu0 0
  %1341 = vmatprep.subr.bf16.mxu0 0
  %1342 = vmatpush2.bf16.msra.mxu0 0
  %1343 = vmatprep.subr.bf16.mxu0 0
  %1344 = vmatpush2.bf16.msra.mxu0 0
  %1345 = vmatprep.subr.bf16.mxu0 0
  %1346 = vmatpush2.bf16.msra.mxu0 0
  %1347 = vmatprep.subr.bf16.mxu0 0
  %1348 = vmatpush2.bf16.msra.mxu0 0
  %1349 = vmatprep.subr.bf16.mxu0 0
  %1350 = vmatpush2.bf16.msra.mxu0 0
  %1351 = vmatprep.subr.bf16.mxu0 0
  %1352 = vmatpush2.bf16.msra.mxu0 0
  %1353 = vmatprep.subr.bf16.mxu0 0
  %1354 = vmatpush2.bf16.msra.mxu0 0
  %1355 = vmatprep.mubr.bf16.mxu0 0
  %1356 = vmatmul.mubr.bf16.gmra.mxu0 %v1318
  %v1357 = vpop.f32.mrf.mxu0
  %v1358 = vadd.f32 %v1315, %v1357
  %v1359 = vpop.f32.mrf.mxu0
  %v1360 = vpop.f32.mrf.mxu0
  %v1361 = vadd.f32 %v1315, %v1360
  %v1362 = vpop.f32.mrf.mxu0
  %1363 = vmatprep.mubr.bf16.mxu0 0
  %1364 = vmatmul.mubr.bf16.gmra.mxu0 %v1321
  %v1365 = vpop.f32.mrf.mxu0
  %v1366 = vadd.f32 %v1315, %v1365
  %v1367 = vpop.f32.mrf.mxu0
  %v1368 = vpop.f32.mrf.mxu0
  %v1369 = vadd.f32 %v1315, %v1368
  %v1370 = vpop.f32.mrf.mxu0
  %1371 = vdwg.mxu0
  %v1372 = vtanh.pop %v1358
  %v1373 = vtanh.pop %v1361
  %v1374 = vtanh.pop %v1366
  %v1375 = vtanh.pop %v1369
  %v1376 = vld [vmem:[%s15] sm:$0x1]
  %v1377 = vsel %vm146, %v1372, 0.0
  %v1378 = vsel %vm146, %v1373, 0.0
  %v1379 = vadd.f32 %v1377, %v1378
  %v1380 = vrot.slane %v1379, 4
  %v1381 = vadd.f32 %v1379, %v1380
  %v1382 = vrot.slane %v1381, 2
  %v1383 = vadd.f32 %v1381, %v1382
  %v1384 = vrot.slane %v1383, 1
  %v1385 = vadd.f32 %v1383, %v1384
  %v1386 = vmul.f32 %v1385, %v726
  %v1387 = vmul.f32 %v1376, %v1386
  %v1388 = vsel %vm729, %v1387, 0.0
  %1389 = vadd.xlane.f32.xlu0 %v1388
  %v1390 = vpop.xlane.xlu0 %1389
  %v1391 = vsel %vm146, %v1374, 0.0
  %v1392 = vsel %vm146, %v1375, 0.0
  %v1393 = vadd.f32 %v1391, %v1392
  %v1394 = vrot.slane %v1393, 4
  %v1395 = vadd.f32 %v1393, %v1394
  %v1396 = vrot.slane %v1395, 2
  %v1397 = vadd.f32 %v1395, %v1396
  %v1398 = vrot.slane %v1397, 1
  %v1399 = vadd.f32 %v1397, %v1398
  %v1400 = vmul.f32 %v1399, %v726
  %v1401 = vmul.f32 %v1376, %v1400
  %v1402 = vsel %vm729, %v1401, 0.0
  %1403 = vadd.xlane.f32.xlu0 %v1402
  %v1404 = vpop.xlane.xlu0 %1403
  %v1405 = vmax.f32 %v1390, %v1404
  %v1406 = vsub.f32 %v1390, %v1405
  %v1407 = vmul.f32 %v1406, 1.442695
  %v1408 = vpow.pop %v1407
  %v1409 = vsub.f32 %v1404, %v1405
  %v1410 = vmul.f32 %v1409, 1.442695
  %v1411 = vpow.pop %v1410
  %v1412 = vadd.f32 %v1408, %v1411
  %v1413 = vrcp.pop %v1412
  %v1414 = vmul.f32 1.0, %v1413
  %v1415 = vmul.f32 %v1408, %v1414
  %v1416 = vlaneseq
  %v1417 = vshrl.u32 %v1416, 7
  %v1418 = vsub.s32 0, %v1417
  %v1419 = vrot.slane %v1415, %v1418
  %v1420 = vmul.f32 %v1419, %v1301
  %v1421 = vmul.f32 %v1419, %v1302
  %v1422 = vmul.f32 %v1411, %v1414
  %v1423 = vlaneseq
  %v1424 = vshrl.u32 %v1423, 7
  %v1425 = vsub.s32 0, %v1424
  %v1426 = vrot.slane %v1422, %v1425
  %v1427 = vmul.f32 %v1426, %v1303
  %v1428 = vmul.f32 %v1426, %v1304
  %v1429 = vadd.f32 %v1420, %v1427
  %v1430 = vadd.f32 %v1421, %v1428
  %v1431 = vpack.c.bf16 %v1430, %v1429
  %v1432 = vld [vmem:[%s16] sm:$0xff]
  %v1433 = vld [vmem:[%s16 + $0x8] sm:$0xff]
  %v1434 = vpack.c.bf16 %v1433, %v1432
  %v1435 = vld [vmem:[%s17] sm:$0x1]
  %v1437 = vlaneseq
  %v1438 = vshrl.u32 %v1437, 7
  %v1439 = vsub.s32 0, %v1438
  %v1440 = vrot.slane %v1435, %v1439
  %v1443 = vsel %vm146, %v1431, 0
  %1445 = vmatprep.subr.bf16.mxu0 0
  %1446 = vmatpush1.bf16.msra.mxu0 0
  %1447 = vmatprep.subr.bf16.mxu0 0
  %1448 = vmatpush1.bf16.msra.mxu0 0
  %1449 = vmatprep.subr.bf16.mxu0 0
  %1450 = vmatpush1.bf16.msra.mxu0 0
  %1451 = vmatprep.subr.bf16.mxu0 0
  %1452 = vmatpush1.bf16.msra.mxu0 0
  %1453 = vmatprep.subr.bf16.mxu0 0
  %1454 = vmatpush1.bf16.msra.mxu0 0
  %1455 = vmatprep.subr.bf16.mxu0 0
  %1456 = vmatpush1.bf16.msra.mxu0 0
  %1457 = vmatprep.subr.bf16.mxu0 0
  %1458 = vmatpush1.bf16.msra.mxu0 0
  %1459 = vmatprep.subr.bf16.mxu0 0
  %1460 = vmatpush1.bf16.msra.mxu0 %v1434
  %1461 = vmatprep.subr.bf16.mxu0 0
  %1462 = vmatpush2.bf16.msra.mxu0 0
  %1463 = vmatprep.subr.bf16.mxu0 0
  %1464 = vmatpush2.bf16.msra.mxu0 0
  %1465 = vmatprep.subr.bf16.mxu0 0
  %1466 = vmatpush2.bf16.msra.mxu0 0
  %1467 = vmatprep.subr.bf16.mxu0 0
  %1468 = vmatpush2.bf16.msra.mxu0 0
  %1469 = vmatprep.subr.bf16.mxu0 0
  %1470 = vmatpush2.bf16.msra.mxu0 0
  %1471 = vmatprep.subr.bf16.mxu0 0
  %1472 = vmatpush2.bf16.msra.mxu0 0
  %1473 = vmatprep.subr.bf16.mxu0 0
  %1474 = vmatpush2.bf16.msra.mxu0 0
  %1475 = vmatprep.subr.bf16.mxu0 0
  %1476 = vmatpush2.bf16.msra.mxu0 0
  %1477 = vmatprep.mubr.bf16.mxu0 0
  %1478 = vmatmul.mubr.bf16.gmra.mxu0 %v1443
  %v1479 = vpop.f32.mrf.mxu0
  %v1480 = vadd.f32 %v1440, %v1479
  %v1481 = vpop.f32.mrf.mxu0
  %v1482 = vpop.f32.mrf.mxu0
  %v1483 = vadd.f32 %v1440, %v1482
  %v1484 = vpop.f32.mrf.mxu0
  %1485 = vdwg.mxu0
  %v1486 = vpack.c.bf16 %v1483, %v1480
  %v1487 = vld [vmem:[%s18] sm:$0xff]
  %v1488 = vld [vmem:[%s18 + $0x8] sm:$0xff]
  %v1489 = vld [vmem:[%s18 + $0x10] sm:$0xff]
  %v1490 = vld [vmem:[%s18 + $0x18] sm:$0xff]
  %v1491 = vpack.c.bf16 %v1488, %v1487
  %v1492 = vpack.c.bf16 %v1490, %v1489
  %v1493 = vld [vmem:[%s19] sm:$0x1]
  %v1495 = vlaneseq
  %v1496 = vshrl.u32 %v1495, 7
  %v1497 = vsub.s32 0, %v1496
  %v1498 = vrot.slane %v1493, %v1497
  %vm1500 = vcmask 261120
  %v1502 = vsel %vm1500, %v1486, 0
  %1504 = vmatprep.subr.bf16.mxu0 0
  %1505 = vmatpush1.bf16.msra.mxu0 0
  %1506 = vmatprep.subr.bf16.mxu0 0
  %1507 = vmatpush1.bf16.msra.mxu0 0
  %1508 = vmatprep.subr.bf16.mxu0 0
  %1509 = vmatpush1.bf16.msra.mxu0 0
  %1510 = vmatprep.subr.bf16.mxu0 0
  %1511 = vmatpush1.bf16.msra.mxu0 0
  %1512 = vmatprep.subr.bf16.mxu0 0
  %1513 = vmatpush1.bf16.msra.mxu0 0
  %1514 = vmatprep.subr.bf16.mxu0 0
  %1515 = vmatpush1.bf16.msra.mxu0 0
  %1516 = vmatprep.subr.bf16.mxu0 0
  %1517 = vmatpush1.bf16.msra.mxu0 %v1492
  %1518 = vmatprep.subr.bf16.mxu0 0
  %1519 = vmatpush1.bf16.msra.mxu0 %v1491
  %1520 = vmatprep.subr.bf16.mxu0 0
  %1521 = vmatpush2.bf16.msra.mxu0 0
  %1522 = vmatprep.subr.bf16.mxu0 0
  %1523 = vmatpush2.bf16.msra.mxu0 0
  %1524 = vmatprep.subr.bf16.mxu0 0
  %1525 = vmatpush2.bf16.msra.mxu0 0
  %1526 = vmatprep.subr.bf16.mxu0 0
  %1527 = vmatpush2.bf16.msra.mxu0 0
  %1528 = vmatprep.subr.bf16.mxu0 0
  %1529 = vmatpush2.bf16.msra.mxu0 0
  %1530 = vmatprep.subr.bf16.mxu0 0
  %1531 = vmatpush2.bf16.msra.mxu0 0
  %1532 = vmatprep.subr.bf16.mxu0 0
  %1533 = vmatpush2.bf16.msra.mxu0 0
  %1534 = vmatprep.subr.bf16.mxu0 0
  %1535 = vmatpush2.bf16.msra.mxu0 0
  %1536 = vmatprep.mubr.bf16.mxu0 0
  %1537 = vmatmul.mubr.bf16.gmra.mxu0 %v1502
  %v1538 = vpop.f32.mrf.mxu0
  %v1539 = vadd.f32 %v1498, %v1538
  %v1540 = vpop.f32.mrf.mxu0
  %v1541 = vpop.f32.mrf.mxu0
  %v1542 = vadd.f32 %v1498, %v1541
  %v1543 = vpop.f32.mrf.mxu0
  %1544 = vdwg.mxu0
  %v1545 = vpack.c.bf16 %v1542, %v1539
  %v1546 = vld [vmem:[%s20] sm:$0xff]
  %v1547 = vld [vmem:[%s20 + $0x8] sm:$0xff]
  %v1548 = vpack.c.bf16 %v1547, %v1546
  %v1549 = vld [vmem:[%s21] sm:$0x1]
  %v1551 = vlaneseq
  %v1552 = vshrl.u32 %v1551, 7
  %v1553 = vsub.s32 0, %v1552
  %v1554 = vrot.slane %v1549, %v1553
  %v1557 = vsel %vm146, %v1545, 0
  %1559 = vmatprep.subr.bf16.mxu0 0
  %1560 = vmatpush1.bf16.msra.mxu0 0
  %1561 = vmatprep.subr.bf16.mxu0 0
  %1562 = vmatpush1.bf16.msra.mxu0 0
  %1563 = vmatprep.subr.bf16.mxu0 0
  %1564 = vmatpush1.bf16.msra.mxu0 0
  %1565 = vmatprep.subr.bf16.mxu0 0
  %1566 = vmatpush1.bf16.msra.mxu0 0
  %1567 = vmatprep.subr.bf16.mxu0 0
  %1568 = vmatpush1.bf16.msra.mxu0 0
  %1569 = vmatprep.subr.bf16.mxu0 0
  %1570 = vmatpush1.bf16.msra.mxu0 0
  %1571 = vmatprep.subr.bf16.mxu0 0
  %1572 = vmatpush1.bf16.msra.mxu0 0
  %1573 = vmatprep.subr.bf16.mxu0 0
  %1574 = vmatpush1.bf16.msra.mxu0 %v1548
  %1575 = vmatprep.subr.bf16.mxu0 0
  %1576 = vmatpush2.bf16.msra.mxu0 0
  %1577 = vmatprep.subr.bf16.mxu0 0
  %1578 = vmatpush2.bf16.msra.mxu0 0
  %1579 = vmatprep.subr.bf16.mxu0 0
  %1580 = vmatpush2.bf16.msra.mxu0 0
  %1581 = vmatprep.subr.bf16.mxu0 0
  %1582 = vmatpush2.bf16.msra.mxu0 0
  %1583 = vmatprep.subr.bf16.mxu0 0
  %1584 = vmatpush2.bf16.msra.mxu0 0
  %1585 = vmatprep.subr.bf16.mxu0 0
  %1586 = vmatpush2.bf16.msra.mxu0 0
  %1587 = vmatprep.subr.bf16.mxu0 0
  %1588 = vmatpush2.bf16.msra.mxu0 0
  %1589 = vmatprep.subr.bf16.mxu0 0
  %1590 = vmatpush2.bf16.msra.mxu0 0
  %1591 = vmatprep.mubr.bf16.mxu0 0
  %1592 = vmatmul.mubr.bf16.gmra.mxu0 %v1557
  %v1593 = vpop.f32.mrf.mxu0
  %v1594 = vadd.f32 %v1554, %v1593
  %v1595 = vpop.f32.mrf.mxu0
  %v1596 = vpop.f32.mrf.mxu0
  %v1597 = vadd.f32 %v1554, %v1596
  %v1598 = vpop.f32.mrf.mxu0
  %1599 = vdwg.mxu0
  %v1600 = vxor.u32 %v1594, 2147483648
  %v1601 = vxor.u32 %v1597, 2147483648
  %v1602 = vmul.f32 %v1600, 1.442695
  %v1603 = vpow.pop %v1602
  %v1604 = vmul.f32 %v1601, 1.442695
  %v1605 = vpow.pop %v1604
  %v1606 = vadd.f32 %v1603, 1.0
  %v1607 = vadd.f32 %v1605, 1.0
  %v1608 = vrcp.pop %v1606
  %v1609 = vmul.f32 1.0, %v1608
  %v1610 = vrcp.pop %v1607
  %v1611 = vmul.f32 1.0, %v1610
  %1612 = vst [vmem:[%s22] sm:$0xff] %v1609
  %1613 = vst [vmem:[%s22 + $0x8] sm:$0xff] %v1611
  // Predicated region
  $region90: #{han_forward.1} parent=0 // pred_check
    _
  $region91: #{han_forward.1} parent=0 // pred_check_branch
    %1615 = sbr.rel (0) target = $region93
  $region92: #{han_forward.1} parent=0 // pred_region
    _
  $region93: #{han_forward.1} parent=0 // pred_fallthru
    _
  // Predicated region
  $region94: #{han_forward.1} parent=0 // pred_check
    _
  $region95: #{han_forward.1} parent=0 // pred_check_branch
    %1617 = sbr.rel (0) target = $region97
  $region96: #{han_forward.1} parent=0 // pred_region
    _
  $region97: #{han_forward.1} parent=0 // pred_fallthru
    _

</llo_original>
